<compile_context>
chip_gen: v7x
topology: tpu7x:2x2x1
jax: 0.10.0
libtpu: 0.0.40
codegen_flags: <defaults>
</compile_context>

<pallas_src>
import jax
import jax.numpy as jnp
from jax.experimental import pallas as pl
from jax.experimental.pallas import tpu as pltpu

# ---- small, module-consistent sizes -----------------------------------------
VOCAB = 50          # vocab_size
EMB = 32            # embedding_dim
USERS = 8           # user_num
BATCH = 2
SEQ = 16            # token sequence length
C = 300             # out channels of every conv (fixed in the module)
KS = (3, 5, 7)      # conv kernel heights (fixed in the module)

KMAX = max(KS)      # 7
CP = 384            # per-branch channels padded 300 -> 384 (multiple of 128)
C3 = 3 * CP         # 1152 merged conv channels
VP = 64             # vocab rows padded 50 -> 64 for the one-hot blocks
KTOT = 512          # fused-matmul K: KMAX*VP = 448, zero-padded to 512
UP = 128            # user_num padded 8 -> 128 (lane-dense output)


def textcnn_kernel(ids_ref, wfold_ref, wl_ref, bias_ref, out_ref):
    BL = ids_ref.shape[0]                 # B * L token positions
    ktot, c3 = wfold_ref.shape            # 512, 1152
    B = out_ref.shape[0]
    L = BL // B

    # --- shifted one-hot LHS: lhs[t, j*VP + v] = (ids[t + j] == v) -----------
    # Static row slices of a (-1)-padded ids buffer (out-of-range rows match
    # nothing -> zero rows). No shift matmuls, no rolls on the critical path.
    v_iota = jax.lax.broadcasted_iota(jnp.int32, (BL, VP), 1)
    ids_b = jnp.broadcast_to(ids_ref[...], (BL, VP))                 # hoisted once
    ids_pad = jnp.concatenate(
        [ids_b, jnp.full((KMAX, VP), -1, jnp.int32)], axis=0)        # (BL+KMAX, VP)
    blocks = [(ids_pad[j:j + BL] == v_iota).astype(jnp.bfloat16)
              for j in range(KMAX)]
    blocks.append(jnp.zeros((BL, ktot - KMAX * VP), jnp.bfloat16))   # K 448 -> 512
    lhs = jnp.concatenate(blocks, axis=1)                            # (BL, 512) bf16

    # --- ONE fused MXU matmul: embedding gather + all three convs ------------
    acc = jnp.dot(lhs, wfold_ref[...],
                  preferred_element_type=jnp.float32)                # (BL, C3) f32

    # --- conv bias + relu (dropout = identity in eval mode) ------------------
    act = jnp.maximum(acc + bias_ref[:, :c3], 0.0)                   # (BL, C3) f32

    # --- per-branch max-pool over statically valid positions -----------------
    # (B, L, C3) reshape is a layout-preserving sublane split (L multiple of 8);
    # channel slices are 384-wide (3 x 128 lanes). Invalid rows (t > L-k) are
    # excluded by the static row range, so wraparound/cross-batch garbage in acc
    # never reaches the max.
    act3 = act.reshape(B, L, c3)
    pools = [jnp.max(act3[:, :L - k + 1, i * CP:(i + 1) * CP], axis=1)
             for i, k in enumerate(KS)]
    pooled = jnp.concatenate(pools, axis=1)                          # (B, C3) f32

    # --- fused final linear (USERS padded to 128 lanes) ----------------------
    out = jnp.dot(pooled.astype(jnp.bfloat16), wl_ref[...],
                  preferred_element_type=jnp.float32) + bias_ref[:, c3:]
    out_ref[...] = out.astype(out_ref.dtype)


def prepare_params(params):
    """One-time re-layout of the raw (PyTorch-style) params for the kernel."""
    emb_table, w1, b1, w2, b2, w3, b3, wl, bl = params

    # vocab-padded f32 table (extra rows zero, never selected)
    table = jnp.pad(emb_table, ((0, VP - VOCAB), (0, 0)))            # (VP, E)

    # merged, channel-padded conv weight: (KMAX, E, 3*CP)
    def pad_w(w):
        return jnp.pad(w, ((0, KMAX - w.shape[0]), (0, 0), (0, CP - C)))
    w_all = jnp.concatenate([pad_w(w1), pad_w(w2), pad_w(w3)], axis=2)

    # fold the embedding table into the conv weights:
    #   wfold[j*VP + v, c] = sum_e table[v, e] * w_all[j, e, c]
    wfold = jnp.einsum("ve,jec->jvc", table, w_all).reshape(KMAX * VP, C3)
    wfold = jnp.pad(wfold, ((0, KTOT - KMAX * VP), (0, 0))).astype(jnp.bfloat16)

    # all biases packed into one f32 buffer: [conv bias (C3) | linear bias (UP)]
    b_conv = jnp.concatenate(
        [jnp.pad(b, ((0, 0), (0, CP - C))) for b in (b1, b2, b3)], axis=1)
    b_lin = jnp.pad(bl, ((0, 0), (0, UP - USERS)))
    bias_all = jnp.concatenate([b_conv, b_lin], axis=1)              # (1, C3+UP)

    # final linear re-laid-out to the padded pooled layout, USERS padded to 128
    wl_pad = jnp.pad(wl.reshape(3, C, USERS),
                     ((0, 0), (0, CP - C), (0, UP - USERS))).reshape(C3, UP)
    wl_pad = wl_pad.astype(jnp.bfloat16)

    return wfold, wl_pad, bias_all


def textcnn_forward(token_ids, prepared):
    wfold, wl_pad, bias_all = prepared
    B, L = token_ids.shape
    ids = token_ids.reshape(B * L, 1).astype(jnp.int32)

    out = pl.pallas_call(
        textcnn_kernel,
        out_shape=jax.ShapeDtypeStruct((B, UP), jnp.float32),
        grid=(1,),
        in_specs=[
            pl.BlockSpec(ids.shape, lambda i: (0, 0)),
            pl.BlockSpec(wfold.shape, lambda i: (0, 0)),
            pl.BlockSpec(wl_pad.shape, lambda i: (0, 0)),
            pl.BlockSpec(bias_all.shape, lambda i: (0, 0)),
        ],
        out_specs=pl.BlockSpec((B, UP), lambda i: (0, 0)),
        compiler_params=pltpu.CompilerParams(
            dimension_semantics=("arbitrary",)),
        cost_estimate=pl.CostEstimate(
            flops=2 * (B * L) * KTOT * C3 + 2 * B * C3 * UP,
            transcendentals=0,
            bytes_accessed=(ids.size * 4 + wfold.size * 2 + wl_pad.size * 2
                            + bias_all.size * 4 + B * UP * 4)),
    )(ids, wfold, wl_pad, bias_all)
    return out[:, :USERS]


def reference_forward(token_ids, params):
    """Pure f32 JAX reference mirroring the PyTorch forward (eval mode)."""
    emb_table, w1, b1, w2, b2, w3, b3, wl, bl = params
    embeds = emb_table[token_ids]                                    # (B, L, E)
    B, L, _ = embeds.shape
    pooled = []
    for w, b, k in ((w1, b1, KS[0]), (w2, b2, KS[1]), (w3, b3, KS[2])):
        lout = L - k + 1
        conv = jnp.zeros((B, lout, C), jnp.float32)
        for j in range(k):
            conv = conv + jnp.einsum("ble,ec->blc", embeds[:, j:j + lout, :], w[j])
        conv = jnp.maximum(conv + b, 0.0)
        pooled.append(jnp.max(conv, axis=1))                         # (B, C)
    flat = jnp.concatenate(pooled, axis=1)                           # (B, 3C)
    return flat @ wl + bl


def make_params(key):
    ks = jax.random.split(key, 9)
    emb_table = jax.random.normal(ks[0], (VOCAB, EMB), jnp.float32) * 0.1
    w1 = jax.random.normal(ks[1], (KS[0], EMB, C), jnp.float32) * 0.05
    b1 = jax.random.normal(ks[2], (1, C), jnp.float32) * 0.01
    w2 = jax.random.normal(ks[3], (KS[1], EMB, C), jnp.float32) * 0.05
    b2 = jax.random.normal(ks[4], (1, C), jnp.float32) * 0.01
    w3 = jax.random.normal(ks[5], (KS[2], EMB, C), jnp.float32) * 0.05
    b3 = jax.random.normal(ks[6], (1, C), jnp.float32) * 0.01
    wl = jax.random.normal(ks[7], (3 * C, USERS), jnp.float32) * 0.02
    bl = jax.random.normal(ks[8], (1, USERS), jnp.float32) * 0.01
    return (emb_table, w1, b1, w2, b2, w3, b3, wl, bl)


if __name__ == "__main__":
    key = jax.random.PRNGKey(0)
    k_tok, k_par = jax.random.split(key)
    token_ids = jax.random.randint(k_tok, (BATCH, SEQ), 0, VOCAB, dtype=jnp.int32)
    params = make_params(k_par)
    prepared = prepare_params(params)

    out = textcnn_forward(token_ids, prepared)
    out = jax.block_until_ready(out)

    ref = reference_forward(token_ids, params)
    assert out.shape == (BATCH, USERS)
    # bf16 folded weights / bf16 final matmul with f32 accumulation vs f32 reference
    assert jnp.allclose(out, ref, atol=2e-3, rtol=2e-3), "mismatch vs reference"

    print("KERNEL_OK")
</pallas_src>

<mosaic_0001>
module attributes {stable_mosaic.version = 11 : i64} {
  func.func @textcnn_kernel(%arg0: i32, %arg1: memref<32x1xi32, #tpu.memory_space<vmem>>, %arg2: memref<512x1152xbf16, #tpu.memory_space<vmem>>, %arg3: memref<1152x128xbf16, #tpu.memory_space<vmem>>, %arg4: memref<1x1280xf32, #tpu.memory_space<vmem>>, %arg5: memref<2x128xf32, #tpu.memory_space<vmem>>) attributes {dimension_semantics = [#tpu.dimension_semantics<arbitrary>], iteration_bounds = array<i64: 1>, scalar_prefetch = 0 : i64, scratch_operands = 0 : i64, tpu.core_type = #tpu.core_type<tc>, window_params = [{pipeline_mode = #tpu.pipeline_mode<synchronous>, transform_indices = @transform_0, window_bounds = array<i64: 32, 1>}, {pipeline_mode = #tpu.pipeline_mode<synchronous>, transform_indices = @transform_1, window_bounds = array<i64: 512, 1152>}, {pipeline_mode = #tpu.pipeline_mode<synchronous>, transform_indices = @transform_2, window_bounds = array<i64: 1152, 128>}, {pipeline_mode = #tpu.pipeline_mode<synchronous>, transform_indices = @transform_3, window_bounds = array<i64: 1, 1280>}, {pipeline_mode = #tpu.pipeline_mode<synchronous>, transform_indices = @transform_4, window_bounds = array<i64: 2, 128>}]} {
    %0 = tpu.iota {dimensions = array<i32: 1>} : vector<32x64xi32>
    %c0 = arith.constant 0 : index
    %c0_0 = arith.constant 0 : index
    %1 = vector.load %arg1[%c0, %c0_0] : memref<32x1xi32, #tpu.memory_space<vmem>>, vector<32x1xi32>
    %2 = vector.shape_cast %1 : vector<32x1xi32> to vector<32x1xi32>
    %3 = vector.broadcast %2 : vector<32x1xi32> to vector<32x64xi32>
    %c-1_i32 = arith.constant -1 : i32
    %4 = vector.broadcast %c-1_i32 : i32 to vector<7x64xi32>
    %5 = tpu.concatenate %3, %4 in 0 : vector<32x64xi32>, vector<7x64xi32> -> vector<39x64xi32>
    %6 = vector.extract_strided_slice %5 {offsets = [0, 0], sizes = [32, 64], strides = [1, 1]} : vector<39x64xi32> to vector<32x64xi32>
    %7 = arith.cmpi eq, %6, %0 : vector<32x64xi32>
    %8 = arith.extui %7 : vector<32x64xi1> to vector<32x64xi32>
    %9 = arith.sitofp %8 : vector<32x64xi32> to vector<32x64xf32>
    %10 = arith.truncf %9 : vector<32x64xf32> to vector<32x64xbf16>
    %11 = vector.extract_strided_slice %5 {offsets = [1, 0], sizes = [32, 64], strides = [1, 1]} : vector<39x64xi32> to vector<32x64xi32>
    %12 = arith.cmpi eq, %11, %0 : vector<32x64xi32>
    %13 = arith.extui %12 : vector<32x64xi1> to vector<32x64xi32>
    %14 = arith.sitofp %13 : vector<32x64xi32> to vector<32x64xf32>
    %15 = arith.truncf %14 : vector<32x64xf32> to vector<32x64xbf16>
    %16 = vector.extract_strided_slice %5 {offsets = [2, 0], sizes = [32, 64], strides = [1, 1]} : vector<39x64xi32> to vector<32x64xi32>
    %17 = arith.cmpi eq, %16, %0 : vector<32x64xi32>
    %18 = arith.extui %17 : vector<32x64xi1> to vector<32x64xi32>
    %19 = arith.sitofp %18 : vector<32x64xi32> to vector<32x64xf32>
    %20 = arith.truncf %19 : vector<32x64xf32> to vector<32x64xbf16>
    %21 = vector.extract_strided_slice %5 {offsets = [3, 0], sizes = [32, 64], strides = [1, 1]} : vector<39x64xi32> to vector<32x64xi32>
    %22 = arith.cmpi eq, %21, %0 : vector<32x64xi32>
    %23 = arith.extui %22 : vector<32x64xi1> to vector<32x64xi32>
    %24 = arith.sitofp %23 : vector<32x64xi32> to vector<32x64xf32>
    %25 = arith.truncf %24 : vector<32x64xf32> to vector<32x64xbf16>
    %26 = vector.extract_strided_slice %5 {offsets = [4, 0], sizes = [32, 64], strides = [1, 1]} : vector<39x64xi32> to vector<32x64xi32>
    %27 = arith.cmpi eq, %26, %0 : vector<32x64xi32>
    %28 = arith.extui %27 : vector<32x64xi1> to vector<32x64xi32>
    %29 = arith.sitofp %28 : vector<32x64xi32> to vector<32x64xf32>
    %30 = arith.truncf %29 : vector<32x64xf32> to vector<32x64xbf16>
    %31 = vector.extract_strided_slice %5 {offsets = [5, 0], sizes = [32, 64], strides = [1, 1]} : vector<39x64xi32> to vector<32x64xi32>
    %32 = arith.cmpi eq, %31, %0 : vector<32x64xi32>
    %33 = arith.extui %32 : vector<32x64xi1> to vector<32x64xi32>
    %34 = arith.sitofp %33 : vector<32x64xi32> to vector<32x64xf32>
    %35 = arith.truncf %34 : vector<32x64xf32> to vector<32x64xbf16>
    %36 = vector.extract_strided_slice %5 {offsets = [6, 0], sizes = [32, 64], strides = [1, 1]} : vector<39x64xi32> to vector<32x64xi32>
    %37 = arith.cmpi eq, %36, %0 : vector<32x64xi32>
    %38 = arith.extui %37 : vector<32x64xi1> to vector<32x64xi32>
    %39 = arith.sitofp %38 : vector<32x64xi32> to vector<32x64xf32>
    %40 = arith.truncf %39 : vector<32x64xf32> to vector<32x64xbf16>
    %cst = arith.constant 0.000000e+00 : bf16
    %41 = vector.broadcast %cst : bf16 to vector<32x64xbf16>
    %42 = tpu.concatenate %10, %15, %20, %25, %30, %35, %40, %41 in 1 : vector<32x64xbf16>, vector<32x64xbf16>, vector<32x64xbf16>, vector<32x64xbf16>, vector<32x64xbf16>, vector<32x64xbf16>, vector<32x64xbf16>, vector<32x64xbf16> -> vector<32x512xbf16>
    %c0_1 = arith.constant 0 : index
    %c0_2 = arith.constant 0 : index
    %43 = vector.load %arg2[%c0_1, %c0_2] : memref<512x1152xbf16, #tpu.memory_space<vmem>>, vector<512x1152xbf16>
    %cst_3 = arith.constant dense<0.000000e+00> : vector<32x1152xf32>
    %44 = tpu.matmul %42, %43, %cst_3 {dimension_numbers = #tpu.dot_dimension_numbers<[1], [0], [0], [1], [0, 0, 1, 1], [], []>} : vector<32x512xbf16>, vector<512x1152xbf16>, vector<32x1152xf32> -> vector<32x1152xf32>
    %c0_4 = arith.constant 0 : index
    %c0_5 = arith.constant 0 : index
    %45 = vector.load %arg4[%c0_4, %c0_5] : memref<1x1280xf32, #tpu.memory_space<vmem>>, vector<1x1152xf32>
    %46 = vector.broadcast %45 : vector<1x1152xf32> to vector<32x1152xf32>
    %47 = arith.addf %44, %46 : vector<32x1152xf32>
    %cst_6 = arith.constant 0.000000e+00 : f32
    %48 = vector.broadcast %cst_6 : f32 to vector<32x1152xf32>
    %49 = arith.maximumf %47, %48 : vector<32x1152xf32>
    %50 = vector.shape_cast %49 : vector<32x1152xf32> to vector<2x16x1152xf32>
    %51 = vector.extract_strided_slice %50 {offsets = [0, 0, 0], sizes = [2, 14, 384], strides = [1, 1, 1]} : vector<2x16x1152xf32> to vector<2x14x384xf32>
    %cst_7 = arith.constant dense<0xFF800000> : vector<2x384xf32>
    %52 = vector.multi_reduction <maximumf>, %51, %cst_7 [1] : vector<2x14x384xf32> to vector<2x384xf32>
    %53 = vector.extract_strided_slice %50 {offsets = [0, 0, 384], sizes = [2, 12, 384], strides = [1, 1, 1]} : vector<2x16x1152xf32> to vector<2x12x384xf32>
    %cst_8 = arith.constant dense<0xFF800000> : vector<2x384xf32>
    %54 = vector.multi_reduction <maximumf>, %53, %cst_8 [1] : vector<2x12x384xf32> to vector<2x384xf32>
    %55 = vector.extract_strided_slice %50 {offsets = [0, 0, 768], sizes = [2, 10, 384], strides = [1, 1, 1]} : vector<2x16x1152xf32> to vector<2x10x384xf32>
    %cst_9 = arith.constant dense<0xFF800000> : vector<2x384xf32>
    %56 = vector.multi_reduction <maximumf>, %55, %cst_9 [1] : vector<2x10x384xf32> to vector<2x384xf32>
    %57 = tpu.concatenate %52, %54, %56 in 1 : vector<2x384xf32>, vector<2x384xf32>, vector<2x384xf32> -> vector<2x1152xf32>
    %58 = arith.truncf %57 : vector<2x1152xf32> to vector<2x1152xbf16>
    %c0_10 = arith.constant 0 : index
    %c0_11 = arith.constant 0 : index
    %59 = vector.load %arg3[%c0_10, %c0_11] : memref<1152x128xbf16, #tpu.memory_space<vmem>>, vector<1152x128xbf16>
    %cst_12 = arith.constant dense<0.000000e+00> : vector<2x128xf32>
    %60 = tpu.matmul %58, %59, %cst_12 {dimension_numbers = #tpu.dot_dimension_numbers<[1], [0], [0], [1], [0, 0, 1, 1], [], []>} : vector<2x1152xbf16>, vector<1152x128xbf16>, vector<2x128xf32> -> vector<2x128xf32>
    %c0_13 = arith.constant 0 : index
    %c1152 = arith.constant 1152 : index
    %61 = vector.load %arg4[%c0_13, %c1152] : memref<1x1280xf32, #tpu.memory_space<vmem>>, vector<1x128xf32>
    %62 = vector.broadcast %61 : vector<1x128xf32> to vector<2x128xf32>
    %63 = arith.addf %60, %62 : vector<2x128xf32>
    %c0_14 = arith.constant 0 : index
    %c0_15 = arith.constant 0 : index
    %64 = vector.load %arg5[%c0_14, %c0_15] : memref<2x128xf32, #tpu.memory_space<vmem>>, vector<2x128xf32>
    tpu.vector_store %arg5[%c0_14, %c0_15], %63 {strides = array<i32>} : memref<2x128xf32, #tpu.memory_space<vmem>>, vector<2x128xf32>,
    return
  }
  func.func @transform_0(%arg0: i32) -> (i32, i32) {
    %c0_i32 = arith.constant 0 : i32
    %c0_i32_0 = arith.constant 0 : i32
    %c0_i32_1 = arith.constant 0 : i32
    return %c0_i32, %c0_i32_0 : i32, i32
  }
  func.func @transform_1(%arg0: i32) -> (i32, i32) {
    %c0_i32 = arith.constant 0 : i32
    %c0_i32_0 = arith.constant 0 : i32
    %c0_i32_1 = arith.constant 0 : i32
    return %c0_i32, %c0_i32_0 : i32, i32
  }
  func.func @transform_2(%arg0: i32) -> (i32, i32) {
    %c0_i32 = arith.constant 0 : i32
    %c0_i32_0 = arith.constant 0 : i32
    %c0_i32_1 = arith.constant 0 : i32
    return %c0_i32, %c0_i32_0 : i32, i32
  }
  func.func @transform_3(%arg0: i32) -> (i32, i32) {
    %c0_i32 = arith.constant 0 : i32
    %c0_i32_0 = arith.constant 0 : i32
    %c0_i32_1 = arith.constant 0 : i32
    return %c0_i32, %c0_i32_0 : i32, i32
  }
  func.func @transform_4(%arg0: i32) -> (i32, i32) {
    %c0_i32 = arith.constant 0 : i32
    %c0_i32_0 = arith.constant 0 : i32
    %c0_i32_1 = arith.constant 0 : i32
    return %c0_i32, %c0_i32_0 : i32, i32
  }
}

</mosaic_0001>

<llo_original>
// kernel: tpu_custom_call.1
$region0: #{tpu_custom_call.1}
  #allocation0 [shape = 'u32[]', space=smem, size = 0x4, offset = 0x4, fixed_abs, tag = 'smem constant byte address 0x4 - core index']
  #allocation1 [shape = 'u32[144,128]{1,0:T(1,128)}', space=vmem, size = 0x12000, scoped, tag = 'internal scratch']
  %s0 = inlined_call_operand.vmem [shape: s32[32,1], index: 0, kind: input, shape index: {}]
  %s1 = inlined_call_operand.hbm [shape: bf16[512,1152], index: 1, kind: input, shape index: {}]
  %s2 = inlined_call_operand.hbm [shape: bf16[1152,128], index: 2, kind: input, shape index: {}]
  %s3 = inlined_call_operand.hbm [shape: f32[1,1280], index: 3, kind: input, shape index: {}]
  %s4 = inlined_call_operand.hbm [shape: f32[2,128], index: 4, kind: output, shape index: {}]
  %s5 = sld [smem:[#allocation0]]
  $region38: #{tpu_custom_call.1} parent=0
    _
  %s7 = ssub.s32 1, %s5
  %s8 = scalar_select 0, %s7, %s5
  $region1: #{tpu_custom_call.1} parent=0
    #allocation2 [shape = 'u8[1179648]{0}', space=vmem, size = 0x120000, scoped, tag = 'input window, operand 1, single buffered']
    #allocation3 [shape = 's32[1]{0}', space=sflag, size = 0x4, scoped, tag = 'scoped memory for tpu_custom_call.1']
    #allocation4 [shape = 's32[1]{0}', space=sflag, size = 0x4, scoped, tag = 'scoped memory for tpu_custom_call.1']
    #allocation5 [shape = 'u8[294912]{0}', space=vmem, size = 0x48000, scoped, tag = 'input window, operand 2, single buffered']
    #allocation6 [shape = 's32[1]{0}', space=sflag, size = 0x4, scoped, tag = 'scoped memory for tpu_custom_call.1']
    #allocation7 [shape = 'u8[5120]{0}', space=vmem, size = 0x1400, scoped, tag = 'input window, operand 3, single buffered']
    #allocation8 [shape = 'u8[1024]{0}', space=vmem, size = 0x400, scoped, tag = 'output window, operand 0, single buffered']
    %9 = vsyncpa [#allocation3], 0
    %10 = vsyncpa [#allocation6], 0
    %11 = vsyncpa [#allocation4], 0
    // Predicated region
    $region2: #{tpu_custom_call.1} parent=1 // pred_check
      _
    $region3: #{tpu_custom_call.1} parent=1 // pred_check_branch
      %13 = sbr.rel (0) target = $region5
    $region4: #{tpu_custom_call.1} parent=1 // pred_region
      _
    $region5: #{tpu_custom_call.1} parent=1 // pred_fallthru
      _
    // Predicated region
    $region6: #{tpu_custom_call.1} parent=1 // pred_check
      _
    $region7: #{tpu_custom_call.1} parent=1 // pred_check_branch
      %15 = sbr.rel (0) target = $region9
    $region8: #{tpu_custom_call.1} parent=1 // pred_region
      %s17 = ssub.s32 36864, 36864
      %18 = vsyncadd [#allocation3], %s17
      %s19 = sshll.u32 [#allocation2], 4
      %s20 = int_to_ptr.vmem [resolvable:$true] %s19
      %25 = dma.hbm_to_vmem [thread:$0]  %s1, 36864, %s20, [#allocation3], 576, 576, 36
    $region9: #{tpu_custom_call.1} parent=1 // pred_fallthru
      _
    // Predicated region
    $region10: #{tpu_custom_call.1} parent=1 // pred_check
      _
    $region11: #{tpu_custom_call.1} parent=1 // pred_check_branch
      %27 = sbr.rel (0) target = $region13
    $region12: #{tpu_custom_call.1} parent=1 // pred_region
      %s29 = ssub.s32 9216, 9216
      %30 = vsyncadd [#allocation6], %s29
      %s31 = sshll.u32 [#allocation5], 4
      %s32 = int_to_ptr.vmem [resolvable:$true] %s31
      %37 = dma.hbm_to_vmem [thread:$0]  %s2, 9216, %s32, [#allocation6], 64, 64, 4
    $region13: #{tpu_custom_call.1} parent=1 // pred_fallthru
      _
    // Predicated region
    $region14: #{tpu_custom_call.1} parent=1 // pred_check
      _
    $region15: #{tpu_custom_call.1} parent=1 // pred_check_branch
      %39 = sbr.rel (0) target = $region17
    $region16: #{tpu_custom_call.1} parent=1 // pred_region
      %s41 = ssub.s32 160, 160
      %42 = vsyncadd [#allocation6], %s41
      %s44 = sshll.u32 [#allocation7], 4
      %s45 = int_to_ptr.vmem [resolvable:$true] %s44
      %47 = dma.hbm_to_vmem [thread:$0]  %s3, 160, %s45, [#allocation6]
    $region17: #{tpu_custom_call.1} parent=1 // pred_fallthru
      _
    // Predicated region
    $region18: #{tpu_custom_call.1} parent=1 // pred_check
      _
    $region19: #{tpu_custom_call.1} parent=1 // pred_check_branch
      %49 = sbr.rel (0) target = $region21
    $region20: #{tpu_custom_call.1} parent=1 // pred_region
      %50 = dma.done [#allocation3], 36864
    $region21: #{tpu_custom_call.1} parent=1 // pred_fallthru
      _
    // Predicated region
    $region22: #{tpu_custom_call.1} parent=1 // pred_check
      _
    $region23: #{tpu_custom_call.1} parent=1 // pred_check_branch
      %52 = sbr.rel (0) target = $region25
    $region24: #{tpu_custom_call.1} parent=1 // pred_region
      %53 = dma.done [#allocation6], 9216
    $region25: #{tpu_custom_call.1} parent=1 // pred_fallthru
      _
    // Predicated region
    $region26: #{tpu_custom_call.1} parent=1 // pred_check
      _
    $region27: #{tpu_custom_call.1} parent=1 // pred_check_branch
      %55 = sbr.rel (0) target = $region29
    $region28: #{tpu_custom_call.1} parent=1 // pred_region
      %56 = dma.done [#allocation6], 160
    $region29: #{tpu_custom_call.1} parent=1 // pred_fallthru
      _
    %v58 = vlaneseq
    %v59 = vand.u32 %v58, 127
    %v60 = vld [vmem:[%s0] sm:$0xff]
    %v61 = vld [vmem:[%s0 + $0x8] sm:$0xff]
    %v62 = vld [vmem:[%s0 + $0x10] sm:$0xff]
    %v63 = vld [vmem:[%s0 + $0x18] sm:$0xff]
    %64 = vset.pattern.permute.xlu0 0
    %65 = vperm.xlu0 %64, %v60
    %v66 = vpop.permute.xlu0 %65
    %67 = vset.pattern.permute.xlu0 0
    %68 = vperm.xlu0 %67, %v61
    %v69 = vpop.permute.xlu0 %68
    %70 = vset.pattern.permute.xlu0 0
    %71 = vperm.xlu0 %70, %v62
    %v72 = vpop.permute.xlu0 %71
    %73 = vset.pattern.permute.xlu0 0
    %74 = vperm.xlu0 %73, %v63
    %v75 = vpop.permute.xlu0 %74
    %vm76 = vcmp.eq.s32.totalorder %v66, %v59
    %vm77 = vcmp.eq.s32.totalorder %v69, %v59
    %vm78 = vcmp.eq.s32.totalorder %v72, %v59
    %vm79 = vcmp.eq.s32.totalorder %v75, %v59
    %v80 = vsel %vm76, 1, 0
    %v81 = vsel %vm77, 1, 0
    %v82 = vsel %vm78, 1, 0
    %v83 = vsel %vm79, 1, 0
    %v84 = vcvt.s32.f32 %v80
    %v85 = vcvt.s32.f32 %v81
    %v86 = vcvt.s32.f32 %v82
    %v87 = vcvt.s32.f32 %v83
    %v88 = vpack.c.bf16 %v85, %v84
    %v89 = vpack.c.bf16 %v87, %v86
    %vm90 = vcmp.eq.s32.totalorder %v59, 4294967295
    %v91 = vsel %vm90, 1, 0
    %v92 = vcvt.s32.f32 %v91
    %v93 = vpack.c.bf16 %v92, %v92
    %vm94 = vsmask.f32 7424
    %v96 = vshrl.u32 %v88, 16
    %v98 = vshll.u32 %v88, 16
    %v100 = vrot.slane %v98, 1
    %v101 = vor.u32 %v96, %v100
    %v103 = vshll.u32 %v89, 16
    %v105 = vrot.slane %v103, 1
    %v106 = vsel %vm94, %v101, %v105
    %v107 = vshrl.u32 %v89, 16
    %v109 = vor.u32 %v107, %v105
    %v111 = vshll.u32 %v93, 16
    %v113 = vrot.slane %v111, 1
    %v114 = vsel %vm94, %v109, %v113
    %115 = vrot.lane.b32.xlu0 %v106, 64
    %v116 = vpop.permute.xlu0 %115
    %117 = vrot.lane.b32.xlu0 %v114, 64
    %v118 = vpop.permute.xlu0 %117
    %vm122 = vcmask 1046528
    %v123 = vrot.slane %v88, 1
    %v124 = vrot.slane %v89, 1
    %v125 = vsel %vm122, %v123, %v124
    %v126 = vrot.slane %v93, 1
    %v127 = vsel %vm122, %v124, %v126
    %vm128 = vsmask.f32 6400
    %v129 = vrot.slane %v96, 1
    %v130 = vrot.slane %v98, 2
    %v131 = vor.u32 %v129, %v130
    %v132 = vrot.slane %v107, 1
    %v133 = vrot.slane %v103, 2
    %v134 = vor.u32 %v132, %v133
    %v135 = vsel %vm128, %v131, %v134
    %v136 = vshrl.u32 %v93, 16
    %v138 = vrot.slane %v136, 1
    %v139 = vrot.slane %v111, 2
    %v140 = vor.u32 %v138, %v139
    %v141 = vsel %vm128, %v134, %v140
    %142 = vrot.lane.b32.xlu0 %v135, 64
    %v143 = vpop.permute.xlu0 %142
    %144 = vrot.lane.b32.xlu0 %v141, 64
    %v145 = vpop.permute.xlu0 %144
    %vm146 = vcmask 1045504
    %v147 = vrot.slane %v88, 2
    %v148 = vrot.slane %v89, 2
    %v149 = vsel %vm146, %v147, %v148
    %v150 = vrot.slane %v93, 2
    %v151 = vsel %vm146, %v148, %v150
    %vm152 = vsmask.f32 5376
    %v153 = vrot.slane %v96, 2
    %v154 = vrot.slane %v98, 3
    %v155 = vor.u32 %v153, %v154
    %v156 = vrot.slane %v107, 2
    %v157 = vrot.slane %v103, 3
    %v158 = vor.u32 %v156, %v157
    %v159 = vsel %vm152, %v155, %v158
    %v160 = vrot.slane %v136, 2
    %v161 = vrot.slane %v111, 3
    %v162 = vor.u32 %v160, %v161
    %v163 = vsel %vm152, %v158, %v162
    %164 = vrot.lane.b32.xlu0 %v159, 64
    %v165 = vpop.permute.xlu0 %164
    %166 = vrot.lane.b32.xlu0 %v163, 64
    %v167 = vpop.permute.xlu0 %166
    %vm168 = vcmask 1044480
    %v169 = vrot.slane %v88, 3
    %v170 = vrot.slane %v89, 3
    %v171 = vsel %vm168, %v169, %v170
    %v172 = vrot.slane %v93, 3
    %v173 = vsel %vm168, %v170, %v172
    %vm174 = vcmask 523264
    %v176 = vsel %vm174, %v88, %v116
    %v179 = vsel %vm174, %v89, %v118
    %v183 = vsel %vm174, %v125, %v143
    %v187 = vsel %vm174, %v127, %v145
    %v191 = vsel %vm174, %v149, %v165
    %v195 = vsel %vm174, %v151, %v167
    %v199 = vsel %vm174, %v171, 0
    %v202 = vsel %vm174, %v173, 0
    %v204 = vld [vmem:[#allocation2] sm:$0xff]
    %v205 = vld [vmem:[#allocation2 + $0x8] sm:$0xff]
    %v206 = vld [vmem:[#allocation2 + $0x10] sm:$0xff]
    %v207 = vld [vmem:[#allocation2 + $0x18] sm:$0xff]
    %v208 = vld [vmem:[#allocation2 + $0x20] sm:$0xf]
    %v209 = vld [vmem:[#allocation2 + $0x24] sm:$0xff]
    %v210 = vld [vmem:[#allocation2 + $0x2c] sm:$0xff]
    %v211 = vld [vmem:[#allocation2 + $0x34] sm:$0xff]
    %v212 = vld [vmem:[#allocation2 + $0x3c] sm:$0xff]
    %v213 = vld [vmem:[#allocation2 + $0x44] sm:$0xf]
    %v214 = vld [vmem:[#allocation2 + $0x48] sm:$0xff]
    %v215 = vld [vmem:[#allocation2 + $0x50] sm:$0xff]
    %v216 = vld [vmem:[#allocation2 + $0x58] sm:$0xff]
    %v217 = vld [vmem:[#allocation2 + $0x60] sm:$0xff]
    %v218 = vld [vmem:[#allocation2 + $0x68] sm:$0xf]
    %v219 = vld [vmem:[#allocation2 + $0x6c] sm:$0xff]
    %v220 = vld [vmem:[#allocation2 + $0x74] sm:$0xff]
    %v221 = vld [vmem:[#allocation2 + $0x7c] sm:$0xff]
    %v222 = vld [vmem:[#allocation2 + $0x84] sm:$0xff]
    %v223 = vld [vmem:[#allocation2 + $0x8c] sm:$0xf]
    %v224 = vld [vmem:[#allocation2 + $0x90] sm:$0xff]
    %v225 = vld [vmem:[#allocation2 + $0x98] sm:$0xff]
    %v226 = vld [vmem:[#allocation2 + $0xa0] sm:$0xff]
    %v227 = vld [vmem:[#allocation2 + $0xa8] sm:$0xff]
    %v228 = vld [vmem:[#allocation2 + $0xb0] sm:$0xf]
    %v229 = vld [vmem:[#allocation2 + $0xb4] sm:$0xff]
    %v230 = vld [vmem:[#allocation2 + $0xbc] sm:$0xff]
    %v231 = vld [vmem:[#allocation2 + $0xc4] sm:$0xff]
    %v232 = vld [vmem:[#allocation2 + $0xcc] sm:$0xff]
    %v233 = vld [vmem:[#allocation2 + $0xd4] sm:$0xf]
    %v234 = vld [vmem:[#allocation2 + $0xd8] sm:$0xff]
    %v235 = vld [vmem:[#allocation2 + $0xe0] sm:$0xff]
    %v236 = vld [vmem:[#allocation2 + $0xe8] sm:$0xff]
    %v237 = vld [vmem:[#allocation2 + $0xf0] sm:$0xff]
    %v238 = vld [vmem:[#allocation2 + $0xf8] sm:$0xf]
    %v239 = vld [vmem:[#allocation2 + $0xfc] sm:$0xff]
    %v240 = vld [vmem:[#allocation2 + $0x104] sm:$0xff]
    %v241 = vld [vmem:[#allocation2 + $0x10c] sm:$0xff]
    %v242 = vld [vmem:[#allocation2 + $0x114] sm:$0xff]
    %v243 = vld [vmem:[#allocation2 + $0x11c] sm:$0xf]
    %v244 = vld [vmem:[#allocation2 + $0x120] sm:$0xff]
    %v245 = vld [vmem:[#allocation2 + $0x128] sm:$0xff]
    %v246 = vld [vmem:[#allocation2 + $0x130] sm:$0xff]
    %v247 = vld [vmem:[#allocation2 + $0x138] sm:$0xff]
    %v248 = vld [vmem:[#allocation2 + $0x140] sm:$0xf]
    %v249 = vld [vmem:[#allocation2 + $0x144] sm:$0xff]
    %v250 = vld [vmem:[#allocation2 + $0x14c] sm:$0xff]
    %v251 = vld [vmem:[#allocation2 + $0x154] sm:$0xff]
    %v252 = vld [vmem:[#allocation2 + $0x15c] sm:$0xff]
    %v253 = vld [vmem:[#allocation2 + $0x164] sm:$0xf]
    %v254 = vld [vmem:[#allocation2 + $0x168] sm:$0xff]
    %v255 = vld [vmem:[#allocation2 + $0x170] sm:$0xff]
    %v256 = vld [vmem:[#allocation2 + $0x178] sm:$0xff]
    %v257 = vld [vmem:[#allocation2 + $0x180] sm:$0xff]
    %v258 = vld [vmem:[#allocation2 + $0x188] sm:$0xf]
    %v259 = vld [vmem:[#allocation2 + $0x18c] sm:$0xff]
    %v260 = vld [vmem:[#allocation2 + $0x194] sm:$0xff]
    %v261 = vld [vmem:[#allocation2 + $0x19c] sm:$0xff]
    %v262 = vld [vmem:[#allocation2 + $0x1a4] sm:$0xff]
    %v263 = vld [vmem:[#allocation2 + $0x1ac] sm:$0xf]
    %v264 = vld [vmem:[#allocation2 + $0x1b0] sm:$0xff]
    %v265 = vld [vmem:[#allocation2 + $0x1b8] sm:$0xff]
    %v266 = vld [vmem:[#allocation2 + $0x1c0] sm:$0xff]
    %v267 = vld [vmem:[#allocation2 + $0x1c8] sm:$0xff]
    %v268 = vld [vmem:[#allocation2 + $0x1d0] sm:$0xf]
    %v269 = vld [vmem:[#allocation2 + $0x1d4] sm:$0xff]
    %v270 = vld [vmem:[#allocation2 + $0x1dc] sm:$0xff]
    %v271 = vld [vmem:[#allocation2 + $0x1e4] sm:$0xff]
    %v272 = vld [vmem:[#allocation2 + $0x1ec] sm:$0xff]
    %v273 = vld [vmem:[#allocation2 + $0x1f4] sm:$0xf]
    %v274 = vld [vmem:[#allocation2 + $0x1f8] sm:$0xff]
    %v275 = vld [vmem:[#allocation2 + $0x200] sm:$0xff]
    %v276 = vld [vmem:[#allocation2 + $0x208] sm:$0xff]
    %v277 = vld [vmem:[#allocation2 + $0x210] sm:$0xff]
    %v278 = vld [vmem:[#allocation2 + $0x218] sm:$0xf]
    %v279 = vld [vmem:[#allocation2 + $0x21c] sm:$0xff]
    %v280 = vld [vmem:[#allocation2 + $0x224] sm:$0xff]
    %v281 = vld [vmem:[#allocation2 + $0x22c] sm:$0xff]
    %v282 = vld [vmem:[#allocation2 + $0x234] sm:$0xff]
    %v283 = vld [vmem:[#allocation2 + $0x23c] sm:$0xf]
    %v284 = vld [vmem:[#allocation2 + $0x240] sm:$0xff]
    %v285 = vld [vmem:[#allocation2 + $0x248] sm:$0xff]
    %v286 = vld [vmem:[#allocation2 + $0x250] sm:$0xff]
    %v287 = vld [vmem:[#allocation2 + $0x258] sm:$0xff]
    %v288 = vld [vmem:[#allocation2 + $0x260] sm:$0xf]
    %v289 = vld [vmem:[#allocation2 + $0x264] sm:$0xff]
    %v290 = vld [vmem:[#allocation2 + $0x26c] sm:$0xff]
    %v291 = vld [vmem:[#allocation2 + $0x274] sm:$0xff]
    %v292 = vld [vmem:[#allocation2 + $0x27c] sm:$0xff]
    %v293 = vld [vmem:[#allocation2 + $0x284] sm:$0xf]
    %v294 = vld [vmem:[#allocation2 + $0x288] sm:$0xff]
    %v295 = vld [vmem:[#allocation2 + $0x290] sm:$0xff]
    %v296 = vld [vmem:[#allocation2 + $0x298] sm:$0xff]
    %v297 = vld [vmem:[#allocation2 + $0x2a0] sm:$0xff]
    %v298 = vld [vmem:[#allocation2 + $0x2a8] sm:$0xf]
    %v299 = vld [vmem:[#allocation2 + $0x2ac] sm:$0xff]
    %v300 = vld [vmem:[#allocation2 + $0x2b4] sm:$0xff]
    %v301 = vld [vmem:[#allocation2 + $0x2bc] sm:$0xff]
    %v302 = vld [vmem:[#allocation2 + $0x2c4] sm:$0xff]
    %v303 = vld [vmem:[#allocation2 + $0x2cc] sm:$0xf]
    %v304 = vld [vmem:[#allocation2 + $0x2d0] sm:$0xff]
    %v305 = vld [vmem:[#allocation2 + $0x2d8] sm:$0xff]
    %v306 = vld [vmem:[#allocation2 + $0x2e0] sm:$0xff]
    %v307 = vld [vmem:[#allocation2 + $0x2e8] sm:$0xff]
    %v308 = vld [vmem:[#allocation2 + $0x2f0] sm:$0xf]
    %v309 = vld [vmem:[#allocation2 + $0x2f4] sm:$0xff]
    %v310 = vld [vmem:[#allocation2 + $0x2fc] sm:$0xff]
    %v311 = vld [vmem:[#allocation2 + $0x304] sm:$0xff]
    %v312 = vld [vmem:[#allocation2 + $0x30c] sm:$0xff]
    %v313 = vld [vmem:[#allocation2 + $0x314] sm:$0xf]
    %v314 = vld [vmem:[#allocation2 + $0x318] sm:$0xff]
    %v315 = vld [vmem:[#allocation2 + $0x320] sm:$0xff]
    %v316 = vld [vmem:[#allocation2 + $0x328] sm:$0xff]
    %v317 = vld [vmem:[#allocation2 + $0x330] sm:$0xff]
    %v318 = vld [vmem:[#allocation2 + $0x338] sm:$0xf]
    %v319 = vld [vmem:[#allocation2 + $0x33c] sm:$0xff]
    %v320 = vld [vmem:[#allocation2 + $0x344] sm:$0xff]
    %v321 = vld [vmem:[#allocation2 + $0x34c] sm:$0xff]
    %v322 = vld [vmem:[#allocation2 + $0x354] sm:$0xff]
    %v323 = vld [vmem:[#allocation2 + $0x35c] sm:$0xf]
    %v324 = vld [vmem:[#allocation2 + $0x360] sm:$0xff]
    %v325 = vld [vmem:[#allocation2 + $0x368] sm:$0xff]
    %v326 = vld [vmem:[#allocation2 + $0x370] sm:$0xff]
    %v327 = vld [vmem:[#allocation2 + $0x378] sm:$0xff]
    %v328 = vld [vmem:[#allocation2 + $0x380] sm:$0xf]
    %v329 = vld [vmem:[#allocation2 + $0x384] sm:$0xff]
    %v330 = vld [vmem:[#allocation2 + $0x38c] sm:$0xff]
    %v331 = vld [vmem:[#allocation2 + $0x394] sm:$0xff]
    %v332 = vld [vmem:[#allocation2 + $0x39c] sm:$0xff]
    %v333 = vld [vmem:[#allocation2 + $0x3a4] sm:$0xf]
    %v334 = vld [vmem:[#allocation2 + $0x3a8] sm:$0xff]
    %v335 = vld [vmem:[#allocation2 + $0x3b0] sm:$0xff]
    %v336 = vld [vmem:[#allocation2 + $0x3b8] sm:$0xff]
    %v337 = vld [vmem:[#allocation2 + $0x3c0] sm:$0xff]
    %v338 = vld [vmem:[#allocation2 + $0x3c8] sm:$0xf]
    %v339 = vld [vmem:[#allocation2 + $0x3cc] sm:$0xff]
    %v340 = vld [vmem:[#allocation2 + $0x3d4] sm:$0xff]
    %v341 = vld [vmem:[#allocation2 + $0x3dc] sm:$0xff]
    %v342 = vld [vmem:[#allocation2 + $0x3e4] sm:$0xff]
    %v343 = vld [vmem:[#allocation2 + $0x3ec] sm:$0xf]
    %v344 = vld [vmem:[#allocation2 + $0x3f0] sm:$0xff]
    %v345 = vld [vmem:[#allocation2 + $0x3f8] sm:$0xff]
    %v346 = vld [vmem:[#allocation2 + $0x400] sm:$0xff]
    %v347 = vld [vmem:[#allocation2 + $0x408] sm:$0xff]
    %v348 = vld [vmem:[#allocation2 + $0x410] sm:$0xf]
    %v349 = vld [vmem:[#allocation2 + $0x414] sm:$0xff]
    %v350 = vld [vmem:[#allocation2 + $0x41c] sm:$0xff]
    %v351 = vld [vmem:[#allocation2 + $0x424] sm:$0xff]
    %v352 = vld [vmem:[#allocation2 + $0x42c] sm:$0xff]
    %v353 = vld [vmem:[#allocation2 + $0x434] sm:$0xf]
    %v354 = vld [vmem:[#allocation2 + $0x438] sm:$0xff]
    %v355 = vld [vmem:[#allocation2 + $0x440] sm:$0xff]
    %v356 = vld [vmem:[#allocation2 + $0x448] sm:$0xff]
    %v357 = vld [vmem:[#allocation2 + $0x450] sm:$0xff]
    %v358 = vld [vmem:[#allocation2 + $0x458] sm:$0xf]
    %v359 = vld [vmem:[#allocation2 + $0x45c] sm:$0xff]
    %v360 = vld [vmem:[#allocation2 + $0x464] sm:$0xff]
    %v361 = vld [vmem:[#allocation2 + $0x46c] sm:$0xff]
    %v362 = vld [vmem:[#allocation2 + $0x474] sm:$0xff]
    %v363 = vld [vmem:[#allocation2 + $0x47c] sm:$0xf]
    %v364 = vld [vmem:[#allocation2 + $0x480] sm:$0xff]
    %v365 = vld [vmem:[#allocation2 + $0x488] sm:$0xff]
    %v366 = vld [vmem:[#allocation2 + $0x490] sm:$0xff]
    %v367 = vld [vmem:[#allocation2 + $0x498] sm:$0xff]
    %v368 = vld [vmem:[#allocation2 + $0x4a0] sm:$0xf]
    %v369 = vld [vmem:[#allocation2 + $0x4a4] sm:$0xff]
    %v370 = vld [vmem:[#allocation2 + $0x4ac] sm:$0xff]
    %v371 = vld [vmem:[#allocation2 + $0x4b4] sm:$0xff]
    %v372 = vld [vmem:[#allocation2 + $0x4bc] sm:$0xff]
    %v373 = vld [vmem:[#allocation2 + $0x4c4] sm:$0xf]
    %v374 = vld [vmem:[#allocation2 + $0x4c8] sm:$0xff]
    %v375 = vld [vmem:[#allocation2 + $0x4d0] sm:$0xff]
    %v376 = vld [vmem:[#allocation2 + $0x4d8] sm:$0xff]
    %v377 = vld [vmem:[#allocation2 + $0x4e0] sm:$0xff]
    %v378 = vld [vmem:[#allocation2 + $0x4e8] sm:$0xf]
    %v379 = vld [vmem:[#allocation2 + $0x4ec] sm:$0xff]
    %v380 = vld [vmem:[#allocation2 + $0x4f4] sm:$0xff]
    %v381 = vld [vmem:[#allocation2 + $0x4fc] sm:$0xff]
    %v382 = vld [vmem:[#allocation2 + $0x504] sm:$0xff]
    %v383 = vld [vmem:[#allocation2 + $0x50c] sm:$0xf]
    %v384 = vld [vmem:[#allocation2 + $0x510] sm:$0xff]
    %v385 = vld [vmem:[#allocation2 + $0x518] sm:$0xff]
    %v386 = vld [vmem:[#allocation2 + $0x520] sm:$0xff]
    %v387 = vld [vmem:[#allocation2 + $0x528] sm:$0xff]
    %v388 = vld [vmem:[#allocation2 + $0x530] sm:$0xf]
    %v389 = vld [vmem:[#allocation2 + $0x534] sm:$0xff]
    %v390 = vld [vmem:[#allocation2 + $0x53c] sm:$0xff]
    %v391 = vld [vmem:[#allocation2 + $0x544] sm:$0xff]
    %v392 = vld [vmem:[#allocation2 + $0x54c] sm:$0xff]
    %v393 = vld [vmem:[#allocation2 + $0x554] sm:$0xf]
    %v394 = vld [vmem:[#allocation2 + $0x558] sm:$0xff]
    %v395 = vld [vmem:[#allocation2 + $0x560] sm:$0xff]
    %v396 = vld [vmem:[#allocation2 + $0x568] sm:$0xff]
    %v397 = vld [vmem:[#allocation2 + $0x570] sm:$0xff]
    %v398 = vld [vmem:[#allocation2 + $0x578] sm:$0xf]
    %v399 = vld [vmem:[#allocation2 + $0x57c] sm:$0xff]
    %v400 = vld [vmem:[#allocation2 + $0x584] sm:$0xff]
    %v401 = vld [vmem:[#allocation2 + $0x58c] sm:$0xff]
    %v402 = vld [vmem:[#allocation2 + $0x594] sm:$0xff]
    %v403 = vld [vmem:[#allocation2 + $0x59c] sm:$0xf]
    %v404 = vld [vmem:[#allocation2 + $0x5a0] sm:$0xff]
    %v405 = vld [vmem:[#allocation2 + $0x5a8] sm:$0xff]
    %v406 = vld [vmem:[#allocation2 + $0x5b0] sm:$0xff]
    %v407 = vld [vmem:[#allocation2 + $0x5b8] sm:$0xff]
    %v408 = vld [vmem:[#allocation2 + $0x5c0] sm:$0xf]
    %v409 = vld [vmem:[#allocation2 + $0x5c4] sm:$0xff]
    %v410 = vld [vmem:[#allocation2 + $0x5cc] sm:$0xff]
    %v411 = vld [vmem:[#allocation2 + $0x5d4] sm:$0xff]
    %v412 = vld [vmem:[#allocation2 + $0x5dc] sm:$0xff]
    %v413 = vld [vmem:[#allocation2 + $0x5e4] sm:$0xf]
    %v414 = vld [vmem:[#allocation2 + $0x5e8] sm:$0xff]
    %v415 = vld [vmem:[#allocation2 + $0x5f0] sm:$0xff]
    %v416 = vld [vmem:[#allocation2 + $0x5f8] sm:$0xff]
    %v417 = vld [vmem:[#allocation2 + $0x600] sm:$0xff]
    %v418 = vld [vmem:[#allocation2 + $0x608] sm:$0xf]
    %v419 = vld [vmem:[#allocation2 + $0x60c] sm:$0xff]
    %v420 = vld [vmem:[#allocation2 + $0x614] sm:$0xff]
    %v421 = vld [vmem:[#allocation2 + $0x61c] sm:$0xff]
    %v422 = vld [vmem:[#allocation2 + $0x624] sm:$0xff]
    %v423 = vld [vmem:[#allocation2 + $0x62c] sm:$0xf]
    %v424 = vld [vmem:[#allocation2 + $0x630] sm:$0xff]
    %v425 = vld [vmem:[#allocation2 + $0x638] sm:$0xff]
    %v426 = vld [vmem:[#allocation2 + $0x640] sm:$0xff]
    %v427 = vld [vmem:[#allocation2 + $0x648] sm:$0xff]
    %v428 = vld [vmem:[#allocation2 + $0x650] sm:$0xf]
    %v429 = vld [vmem:[#allocation2 + $0x654] sm:$0xff]
    %v430 = vld [vmem:[#allocation2 + $0x65c] sm:$0xff]
    %v431 = vld [vmem:[#allocation2 + $0x664] sm:$0xff]
    %v432 = vld [vmem:[#allocation2 + $0x66c] sm:$0xff]
    %v433 = vld [vmem:[#allocation2 + $0x674] sm:$0xf]
    %v434 = vld [vmem:[#allocation2 + $0x678] sm:$0xff]
    %v435 = vld [vmem:[#allocation2 + $0x680] sm:$0xff]
    %v436 = vld [vmem:[#allocation2 + $0x688] sm:$0xff]
    %v437 = vld [vmem:[#allocation2 + $0x690] sm:$0xff]
    %v438 = vld [vmem:[#allocation2 + $0x698] sm:$0xf]
    %v439 = vld [vmem:[#allocation2 + $0x69c] sm:$0xff]
    %v440 = vld [vmem:[#allocation2 + $0x6a4] sm:$0xff]
    %v441 = vld [vmem:[#allocation2 + $0x6ac] sm:$0xff]
    %v442 = vld [vmem:[#allocation2 + $0x6b4] sm:$0xff]
    %v443 = vld [vmem:[#allocation2 + $0x6bc] sm:$0xf]
    %v444 = vld [vmem:[#allocation2 + $0x6c0] sm:$0xff]
    %v445 = vld [vmem:[#allocation2 + $0x6c8] sm:$0xff]
    %v446 = vld [vmem:[#allocation2 + $0x6d0] sm:$0xff]
    %v447 = vld [vmem:[#allocation2 + $0x6d8] sm:$0xff]
    %v448 = vld [vmem:[#allocation2 + $0x6e0] sm:$0xf]
    %v449 = vld [vmem:[#allocation2 + $0x6e4] sm:$0xff]
    %v450 = vld [vmem:[#allocation2 + $0x6ec] sm:$0xff]
    %v451 = vld [vmem:[#allocation2 + $0x6f4] sm:$0xff]
    %v452 = vld [vmem:[#allocation2 + $0x6fc] sm:$0xff]
    %v453 = vld [vmem:[#allocation2 + $0x704] sm:$0xf]
    %v454 = vld [vmem:[#allocation2 + $0x708] sm:$0xff]
    %v455 = vld [vmem:[#allocation2 + $0x710] sm:$0xff]
    %v456 = vld [vmem:[#allocation2 + $0x718] sm:$0xff]
    %v457 = vld [vmem:[#allocation2 + $0x720] sm:$0xff]
    %v458 = vld [vmem:[#allocation2 + $0x728] sm:$0xf]
    %v459 = vld [vmem:[#allocation2 + $0x72c] sm:$0xff]
    %v460 = vld [vmem:[#allocation2 + $0x734] sm:$0xff]
    %v461 = vld [vmem:[#allocation2 + $0x73c] sm:$0xff]
    %v462 = vld [vmem:[#allocation2 + $0x744] sm:$0xff]
    %v463 = vld [vmem:[#allocation2 + $0x74c] sm:$0xf]
    %v464 = vld [vmem:[#allocation2 + $0x750] sm:$0xff]
    %v465 = vld [vmem:[#allocation2 + $0x758] sm:$0xff]
    %v466 = vld [vmem:[#allocation2 + $0x760] sm:$0xff]
    %v467 = vld [vmem:[#allocation2 + $0x768] sm:$0xff]
    %v468 = vld [vmem:[#allocation2 + $0x770] sm:$0xf]
    %v469 = vld [vmem:[#allocation2 + $0x774] sm:$0xff]
    %v470 = vld [vmem:[#allocation2 + $0x77c] sm:$0xff]
    %v471 = vld [vmem:[#allocation2 + $0x784] sm:$0xff]
    %v472 = vld [vmem:[#allocation2 + $0x78c] sm:$0xff]
    %v473 = vld [vmem:[#allocation2 + $0x794] sm:$0xf]
    %v474 = vld [vmem:[#allocation2 + $0x798] sm:$0xff]
    %v475 = vld [vmem:[#allocation2 + $0x7a0] sm:$0xff]
    %v476 = vld [vmem:[#allocation2 + $0x7a8] sm:$0xff]
    %v477 = vld [vmem:[#allocation2 + $0x7b0] sm:$0xff]
    %v478 = vld [vmem:[#allocation2 + $0x7b8] sm:$0xf]
    %v479 = vld [vmem:[#allocation2 + $0x7bc] sm:$0xff]
    %v480 = vld [vmem:[#allocation2 + $0x7c4] sm:$0xff]
    %v481 = vld [vmem:[#allocation2 + $0x7cc] sm:$0xff]
    %v482 = vld [vmem:[#allocation2 + $0x7d4] sm:$0xff]
    %v483 = vld [vmem:[#allocation2 + $0x7dc] sm:$0xf]
    %v484 = vld [vmem:[#allocation2 + $0x7e0] sm:$0xff]
    %v485 = vld [vmem:[#allocation2 + $0x7e8] sm:$0xff]
    %v486 = vld [vmem:[#allocation2 + $0x7f0] sm:$0xff]
    %v487 = vld [vmem:[#allocation2 + $0x7f8] sm:$0xff]
    %v488 = vld [vmem:[#allocation2 + $0x800] sm:$0xf]
    %v489 = vld [vmem:[#allocation2 + $0x804] sm:$0xff]
    %v490 = vld [vmem:[#allocation2 + $0x80c] sm:$0xff]
    %v491 = vld [vmem:[#allocation2 + $0x814] sm:$0xff]
    %v492 = vld [vmem:[#allocation2 + $0x81c] sm:$0xff]
    %v493 = vld [vmem:[#allocation2 + $0x824] sm:$0xf]
    %v494 = vld [vmem:[#allocation2 + $0x828] sm:$0xff]
    %v495 = vld [vmem:[#allocation2 + $0x830] sm:$0xff]
    %v496 = vld [vmem:[#allocation2 + $0x838] sm:$0xff]
    %v497 = vld [vmem:[#allocation2 + $0x840] sm:$0xff]
    %v498 = vld [vmem:[#allocation2 + $0x848] sm:$0xf]
    %v499 = vld [vmem:[#allocation2 + $0x84c] sm:$0xff]
    %v500 = vld [vmem:[#allocation2 + $0x854] sm:$0xff]
    %v501 = vld [vmem:[#allocation2 + $0x85c] sm:$0xff]
    %v502 = vld [vmem:[#allocation2 + $0x864] sm:$0xff]
    %v503 = vld [vmem:[#allocation2 + $0x86c] sm:$0xf]
    %v504 = vld [vmem:[#allocation2 + $0x870] sm:$0xff]
    %v505 = vld [vmem:[#allocation2 + $0x878] sm:$0xff]
    %v506 = vld [vmem:[#allocation2 + $0x880] sm:$0xff]
    %v507 = vld [vmem:[#allocation2 + $0x888] sm:$0xff]
    %v508 = vld [vmem:[#allocation2 + $0x890] sm:$0xf]
    %v509 = vld [vmem:[#allocation2 + $0x894] sm:$0xff]
    %v510 = vld [vmem:[#allocation2 + $0x89c] sm:$0xff]
    %v511 = vld [vmem:[#allocation2 + $0x8a4] sm:$0xff]
    %v512 = vld [vmem:[#allocation2 + $0x8ac] sm:$0xff]
    %v513 = vld [vmem:[#allocation2 + $0x8b4] sm:$0xf]
    %v514 = vld [vmem:[#allocation2 + $0x8b8] sm:$0xff]
    %v515 = vld [vmem:[#allocation2 + $0x8c0] sm:$0xff]
    %v516 = vld [vmem:[#allocation2 + $0x8c8] sm:$0xff]
    %v517 = vld [vmem:[#allocation2 + $0x8d0] sm:$0xff]
    %v518 = vld [vmem:[#allocation2 + $0x8d8] sm:$0xf]
    %v519 = vld [vmem:[#allocation2 + $0x8dc] sm:$0xff]
    %v520 = vld [vmem:[#allocation2 + $0x8e4] sm:$0xff]
    %v521 = vld [vmem:[#allocation2 + $0x8ec] sm:$0xff]
    %v522 = vld [vmem:[#allocation2 + $0x8f4] sm:$0xff]
    %v523 = vld [vmem:[#allocation2 + $0x8fc] sm:$0xf]
    %v524 = vld [vmem:[#allocation7] sm:$0xff]
    %v525 = vld [vmem:[#allocation7 + $0x8] sm:$0x1]
    %v528 = vlaneseq
    %v529 = vshrl.u32 %v528, 7
    %v530 = vsub.s32 0, %v529
    %v531 = vrot.slane %v524, %v530
    %v532 = vlaneseq
    %v533 = vshrl.u32 %v532, 7
    %v534 = vsub.s32 1, %v533
    %v535 = vrot.slane %v524, %v534
    %v536 = vlaneseq
    %v537 = vshrl.u32 %v536, 7
    %v538 = vsub.s32 2, %v537
    %v539 = vrot.slane %v524, %v538
    %v540 = vlaneseq
    %v541 = vshrl.u32 %v540, 7
    %v542 = vsub.s32 3, %v541
    %v543 = vrot.slane %v524, %v542
    %v544 = vlaneseq
    %v545 = vshrl.u32 %v544, 7
    %v546 = vsub.s32 4, %v545
    %v547 = vrot.slane %v524, %v546
    %v548 = vlaneseq
    %v549 = vshrl.u32 %v548, 7
    %v550 = vsub.s32 5, %v549
    %v551 = vrot.slane %v524, %v550
    %v552 = vlaneseq
    %v553 = vshrl.u32 %v552, 7
    %v554 = vsub.s32 6, %v553
    %v555 = vrot.slane %v524, %v554
    %v556 = vlaneseq
    %v557 = vshrl.u32 %v556, 7
    %v558 = vsub.s32 7, %v557
    %v559 = vrot.slane %v524, %v558
    %v560 = vlaneseq
    %v561 = vshrl.u32 %v560, 7
    %v562 = vsub.s32 0, %v561
    %v563 = vrot.slane %v525, %v562
    %v893 = vunpack.c.l.b16 %v204
    %v894 = vunpack.c.h.b16 %v204
    %v895 = vunpack.c.l.b16 %v205
    %v896 = vunpack.c.h.b16 %v205
    %v897 = vunpack.c.l.b16 %v206
    %v898 = vunpack.c.h.b16 %v206
    %v899 = vunpack.c.l.b16 %v207
    %v900 = vunpack.c.h.b16 %v207
    %v901 = vunpack.c.l.b16 %v208
    %v902 = vunpack.c.l.b16 %v209
    %v903 = vunpack.c.h.b16 %v209
    %v904 = vunpack.c.l.b16 %v210
    %v905 = vunpack.c.h.b16 %v210
    %v906 = vunpack.c.l.b16 %v211
    %v907 = vunpack.c.h.b16 %v211
    %v908 = vunpack.c.l.b16 %v212
    %v909 = vunpack.c.h.b16 %v212
    %v910 = vunpack.c.l.b16 %v213
    %v911 = vunpack.c.l.b16 %v214
    %v912 = vunpack.c.h.b16 %v214
    %v913 = vunpack.c.l.b16 %v215
    %v914 = vunpack.c.h.b16 %v215
    %v915 = vunpack.c.l.b16 %v216
    %v916 = vunpack.c.h.b16 %v216
    %v917 = vunpack.c.l.b16 %v217
    %v918 = vunpack.c.h.b16 %v217
    %v919 = vunpack.c.l.b16 %v218
    %v920 = vunpack.c.l.b16 %v219
    %v921 = vunpack.c.h.b16 %v219
    %v922 = vunpack.c.l.b16 %v220
    %v923 = vunpack.c.h.b16 %v220
    %v924 = vunpack.c.l.b16 %v221
    %v925 = vunpack.c.h.b16 %v221
    %v926 = vunpack.c.l.b16 %v222
    %v927 = vunpack.c.h.b16 %v222
    %v928 = vunpack.c.l.b16 %v223
    %v929 = vunpack.c.l.b16 %v224
    %v930 = vunpack.c.h.b16 %v224
    %v931 = vunpack.c.l.b16 %v225
    %v932 = vunpack.c.h.b16 %v225
    %v933 = vunpack.c.l.b16 %v226
    %v934 = vunpack.c.h.b16 %v226
    %v935 = vunpack.c.l.b16 %v227
    %v936 = vunpack.c.h.b16 %v227
    %v937 = vunpack.c.l.b16 %v228
    %v938 = vunpack.c.l.b16 %v229
    %v939 = vunpack.c.h.b16 %v229
    %v940 = vunpack.c.l.b16 %v230
    %v941 = vunpack.c.h.b16 %v230
    %v942 = vunpack.c.l.b16 %v231
    %v943 = vunpack.c.h.b16 %v231
    %v944 = vunpack.c.l.b16 %v232
    %v945 = vunpack.c.h.b16 %v232
    %v946 = vunpack.c.l.b16 %v233
    %v947 = vunpack.c.l.b16 %v234
    %v948 = vunpack.c.h.b16 %v234
    %v949 = vunpack.c.l.b16 %v235
    %v950 = vunpack.c.h.b16 %v235
    %v951 = vunpack.c.l.b16 %v236
    %v952 = vunpack.c.h.b16 %v236
    %v953 = vunpack.c.l.b16 %v237
    %v954 = vunpack.c.h.b16 %v237
    %v955 = vunpack.c.l.b16 %v238
    %v956 = vunpack.c.l.b16 %v239
    %v957 = vunpack.c.h.b16 %v239
    %v958 = vunpack.c.l.b16 %v240
    %v959 = vunpack.c.h.b16 %v240
    %v960 = vunpack.c.l.b16 %v241
    %v961 = vunpack.c.h.b16 %v241
    %v962 = vunpack.c.l.b16 %v242
    %v963 = vunpack.c.h.b16 %v242
    %v964 = vunpack.c.l.b16 %v243
    %v965 = vunpack.c.l.b16 %v244
    %v966 = vunpack.c.h.b16 %v244
    %v967 = vunpack.c.l.b16 %v245
    %v968 = vunpack.c.h.b16 %v245
    %v969 = vunpack.c.l.b16 %v246
    %v970 = vunpack.c.h.b16 %v246
    %v971 = vunpack.c.l.b16 %v247
    %v972 = vunpack.c.h.b16 %v247
    %v973 = vunpack.c.l.b16 %v248
    %v974 = vunpack.c.l.b16 %v249
    %v975 = vunpack.c.h.b16 %v249
    %v976 = vunpack.c.l.b16 %v250
    %v977 = vunpack.c.h.b16 %v250
    %v978 = vunpack.c.l.b16 %v251
    %v979 = vunpack.c.h.b16 %v251
    %v980 = vunpack.c.l.b16 %v252
    %v981 = vunpack.c.h.b16 %v252
    %v982 = vunpack.c.l.b16 %v253
    %v983 = vunpack.c.l.b16 %v254
    %v984 = vunpack.c.h.b16 %v254
    %v985 = vunpack.c.l.b16 %v255
    %v986 = vunpack.c.h.b16 %v255
    %v987 = vunpack.c.l.b16 %v256
    %v988 = vunpack.c.h.b16 %v256
    %v989 = vunpack.c.l.b16 %v257
    %v990 = vunpack.c.h.b16 %v257
    %v991 = vunpack.c.l.b16 %v258
    %v992 = vunpack.c.l.b16 %v259
    %v993 = vunpack.c.h.b16 %v259
    %v994 = vunpack.c.l.b16 %v260
    %v995 = vunpack.c.h.b16 %v260
    %v996 = vunpack.c.l.b16 %v261
    %v997 = vunpack.c.h.b16 %v261
    %v998 = vunpack.c.l.b16 %v262
    %v999 = vunpack.c.h.b16 %v262
    %v1000 = vunpack.c.l.b16 %v263
    %v1001 = vunpack.c.l.b16 %v264
    %v1002 = vunpack.c.h.b16 %v264
    %v1003 = vunpack.c.l.b16 %v265
    %v1004 = vunpack.c.h.b16 %v265
    %v1005 = vunpack.c.l.b16 %v266
    %v1006 = vunpack.c.h.b16 %v266
    %v1007 = vunpack.c.l.b16 %v267
    %v1008 = vunpack.c.h.b16 %v267
    %v1009 = vunpack.c.l.b16 %v268
    %v1010 = vunpack.c.l.b16 %v269
    %v1011 = vunpack.c.h.b16 %v269
    %v1012 = vunpack.c.l.b16 %v270
    %v1013 = vunpack.c.h.b16 %v270
    %v1014 = vunpack.c.l.b16 %v271
    %v1015 = vunpack.c.h.b16 %v271
    %v1016 = vunpack.c.l.b16 %v272
    %v1017 = vunpack.c.h.b16 %v272
    %v1018 = vunpack.c.l.b16 %v273
    %v1019 = vunpack.c.l.b16 %v274
    %v1020 = vunpack.c.h.b16 %v274
    %v1021 = vunpack.c.l.b16 %v275
    %v1022 = vunpack.c.h.b16 %v275
    %v1023 = vunpack.c.l.b16 %v276
    %v1024 = vunpack.c.h.b16 %v276
    %v1025 = vunpack.c.l.b16 %v277
    %v1026 = vunpack.c.h.b16 %v277
    %v1027 = vunpack.c.l.b16 %v278
    %v1028 = vunpack.c.l.b16 %v279
    %v1029 = vunpack.c.h.b16 %v279
    %v1030 = vunpack.c.l.b16 %v280
    %v1031 = vunpack.c.h.b16 %v280
    %v1032 = vunpack.c.l.b16 %v281
    %v1033 = vunpack.c.h.b16 %v281
    %v1034 = vunpack.c.l.b16 %v282
    %v1035 = vunpack.c.h.b16 %v282
    %v1036 = vunpack.c.l.b16 %v283
    %v1037 = vunpack.c.l.b16 %v284
    %v1038 = vunpack.c.h.b16 %v284
    %v1039 = vunpack.c.l.b16 %v285
    %v1040 = vunpack.c.h.b16 %v285
    %v1041 = vunpack.c.l.b16 %v286
    %v1042 = vunpack.c.h.b16 %v286
    %v1043 = vunpack.c.l.b16 %v287
    %v1044 = vunpack.c.h.b16 %v287
    %v1045 = vunpack.c.l.b16 %v288
    %v1046 = vunpack.c.l.b16 %v289
    %v1047 = vunpack.c.h.b16 %v289
    %v1048 = vunpack.c.l.b16 %v290
    %v1049 = vunpack.c.h.b16 %v290
    %v1050 = vunpack.c.l.b16 %v291
    %v1051 = vunpack.c.h.b16 %v291
    %v1052 = vunpack.c.l.b16 %v292
    %v1053 = vunpack.c.h.b16 %v292
    %v1054 = vunpack.c.l.b16 %v293
    %v1055 = vunpack.c.l.b16 %v294
    %v1056 = vunpack.c.h.b16 %v294
    %v1057 = vunpack.c.l.b16 %v295
    %v1058 = vunpack.c.h.b16 %v295
    %v1059 = vunpack.c.l.b16 %v296
    %v1060 = vunpack.c.h.b16 %v296
    %v1061 = vunpack.c.l.b16 %v297
    %v1062 = vunpack.c.h.b16 %v297
    %v1063 = vunpack.c.l.b16 %v298
    %v1064 = vunpack.c.l.b16 %v299
    %v1065 = vunpack.c.h.b16 %v299
    %v1066 = vunpack.c.l.b16 %v300
    %v1067 = vunpack.c.h.b16 %v300
    %v1068 = vunpack.c.l.b16 %v301
    %v1069 = vunpack.c.h.b16 %v301
    %v1070 = vunpack.c.l.b16 %v302
    %v1071 = vunpack.c.h.b16 %v302
    %v1072 = vunpack.c.l.b16 %v303
    %v1073 = vunpack.c.l.b16 %v304
    %v1074 = vunpack.c.h.b16 %v304
    %v1075 = vunpack.c.l.b16 %v305
    %v1076 = vunpack.c.h.b16 %v305
    %v1077 = vunpack.c.l.b16 %v306
    %v1078 = vunpack.c.h.b16 %v306
    %v1079 = vunpack.c.l.b16 %v307
    %v1080 = vunpack.c.h.b16 %v307
    %v1081 = vunpack.c.l.b16 %v308
    %v1082 = vunpack.c.l.b16 %v309
    %v1083 = vunpack.c.h.b16 %v309
    %v1084 = vunpack.c.l.b16 %v310
    %v1085 = vunpack.c.h.b16 %v310
    %v1086 = vunpack.c.l.b16 %v311
    %v1087 = vunpack.c.h.b16 %v311
    %v1088 = vunpack.c.l.b16 %v312
    %v1089 = vunpack.c.h.b16 %v312
    %v1090 = vunpack.c.l.b16 %v313
    %v1091 = vunpack.c.l.b16 %v314
    %v1092 = vunpack.c.h.b16 %v314
    %v1093 = vunpack.c.l.b16 %v315
    %v1094 = vunpack.c.h.b16 %v315
    %v1095 = vunpack.c.l.b16 %v316
    %v1096 = vunpack.c.h.b16 %v316
    %v1097 = vunpack.c.l.b16 %v317
    %v1098 = vunpack.c.h.b16 %v317
    %v1099 = vunpack.c.l.b16 %v318
    %v1100 = vunpack.c.l.b16 %v319
    %v1101 = vunpack.c.h.b16 %v319
    %v1102 = vunpack.c.l.b16 %v320
    %v1103 = vunpack.c.h.b16 %v320
    %v1104 = vunpack.c.l.b16 %v321
    %v1105 = vunpack.c.h.b16 %v321
    %v1106 = vunpack.c.l.b16 %v322
    %v1107 = vunpack.c.h.b16 %v322
    %v1108 = vunpack.c.l.b16 %v323
    %v1109 = vunpack.c.l.b16 %v324
    %v1110 = vunpack.c.h.b16 %v324
    %v1111 = vunpack.c.l.b16 %v325
    %v1112 = vunpack.c.h.b16 %v325
    %v1113 = vunpack.c.l.b16 %v326
    %v1114 = vunpack.c.h.b16 %v326
    %v1115 = vunpack.c.l.b16 %v327
    %v1116 = vunpack.c.h.b16 %v327
    %v1117 = vunpack.c.l.b16 %v328
    %v1118 = vunpack.c.l.b16 %v329
    %v1119 = vunpack.c.h.b16 %v329
    %v1120 = vunpack.c.l.b16 %v330
    %v1121 = vunpack.c.h.b16 %v330
    %v1122 = vunpack.c.l.b16 %v331
    %v1123 = vunpack.c.h.b16 %v331
    %v1124 = vunpack.c.l.b16 %v332
    %v1125 = vunpack.c.h.b16 %v332
    %v1126 = vunpack.c.l.b16 %v333
    %v1127 = vunpack.c.l.b16 %v334
    %v1128 = vunpack.c.h.b16 %v334
    %v1129 = vunpack.c.l.b16 %v335
    %v1130 = vunpack.c.h.b16 %v335
    %v1131 = vunpack.c.l.b16 %v336
    %v1132 = vunpack.c.h.b16 %v336
    %v1133 = vunpack.c.l.b16 %v337
    %v1134 = vunpack.c.h.b16 %v337
    %v1135 = vunpack.c.l.b16 %v338
    %v1136 = vunpack.c.l.b16 %v339
    %v1137 = vunpack.c.h.b16 %v339
    %v1138 = vunpack.c.l.b16 %v340
    %v1139 = vunpack.c.h.b16 %v340
    %v1140 = vunpack.c.l.b16 %v341
    %v1141 = vunpack.c.h.b16 %v341
    %v1142 = vunpack.c.l.b16 %v342
    %v1143 = vunpack.c.h.b16 %v342
    %v1144 = vunpack.c.l.b16 %v343
    %v1145 = vunpack.c.l.b16 %v344
    %v1146 = vunpack.c.h.b16 %v344
    %v1147 = vunpack.c.l.b16 %v345
    %v1148 = vunpack.c.h.b16 %v345
    %v1149 = vunpack.c.l.b16 %v346
    %v1150 = vunpack.c.h.b16 %v346
    %v1151 = vunpack.c.l.b16 %v347
    %v1152 = vunpack.c.h.b16 %v347
    %v1153 = vunpack.c.l.b16 %v348
    %v1154 = vunpack.c.l.b16 %v349
    %v1155 = vunpack.c.h.b16 %v349
    %v1156 = vunpack.c.l.b16 %v350
    %v1157 = vunpack.c.h.b16 %v350
    %v1158 = vunpack.c.l.b16 %v351
    %v1159 = vunpack.c.h.b16 %v351
    %v1160 = vunpack.c.l.b16 %v352
    %v1161 = vunpack.c.h.b16 %v352
    %v1162 = vunpack.c.l.b16 %v353
    %v1163 = vunpack.c.l.b16 %v354
    %v1164 = vunpack.c.h.b16 %v354
    %v1165 = vunpack.c.l.b16 %v355
    %v1166 = vunpack.c.h.b16 %v355
    %v1167 = vunpack.c.l.b16 %v356
    %v1168 = vunpack.c.h.b16 %v356
    %v1169 = vunpack.c.l.b16 %v357
    %v1170 = vunpack.c.h.b16 %v357
    %v1171 = vunpack.c.l.b16 %v358
    %v1172 = vunpack.c.l.b16 %v359
    %v1173 = vunpack.c.h.b16 %v359
    %v1174 = vunpack.c.l.b16 %v360
    %v1175 = vunpack.c.h.b16 %v360
    %v1176 = vunpack.c.l.b16 %v361
    %v1177 = vunpack.c.h.b16 %v361
    %v1178 = vunpack.c.l.b16 %v362
    %v1179 = vunpack.c.h.b16 %v362
    %v1180 = vunpack.c.l.b16 %v363
    %v1181 = vunpack.c.l.b16 %v364
    %v1182 = vunpack.c.h.b16 %v364
    %v1183 = vunpack.c.l.b16 %v365
    %v1184 = vunpack.c.h.b16 %v365
    %v1185 = vunpack.c.l.b16 %v366
    %v1186 = vunpack.c.h.b16 %v366
    %v1187 = vunpack.c.l.b16 %v367
    %v1188 = vunpack.c.h.b16 %v367
    %v1189 = vunpack.c.l.b16 %v368
    %v1190 = vunpack.c.l.b16 %v369
    %v1191 = vunpack.c.h.b16 %v369
    %v1192 = vunpack.c.l.b16 %v370
    %v1193 = vunpack.c.h.b16 %v370
    %v1194 = vunpack.c.l.b16 %v371
    %v1195 = vunpack.c.h.b16 %v371
    %v1196 = vunpack.c.l.b16 %v372
    %v1197 = vunpack.c.h.b16 %v372
    %v1198 = vunpack.c.l.b16 %v373
    %v1199 = vunpack.c.l.b16 %v374
    %v1200 = vunpack.c.h.b16 %v374
    %v1201 = vunpack.c.l.b16 %v375
    %v1202 = vunpack.c.h.b16 %v375
    %v1203 = vunpack.c.l.b16 %v376
    %v1204 = vunpack.c.h.b16 %v376
    %v1205 = vunpack.c.l.b16 %v377
    %v1206 = vunpack.c.h.b16 %v377
    %v1207 = vunpack.c.l.b16 %v378
    %v1208 = vunpack.c.l.b16 %v379
    %v1209 = vunpack.c.h.b16 %v379
    %v1210 = vunpack.c.l.b16 %v380
    %v1211 = vunpack.c.h.b16 %v380
    %v1212 = vunpack.c.l.b16 %v381
    %v1213 = vunpack.c.h.b16 %v381
    %v1214 = vunpack.c.l.b16 %v382
    %v1215 = vunpack.c.h.b16 %v382
    %v1216 = vunpack.c.l.b16 %v383
    %v1217 = vunpack.c.l.b16 %v384
    %v1218 = vunpack.c.h.b16 %v384
    %v1219 = vunpack.c.l.b16 %v385
    %v1220 = vunpack.c.h.b16 %v385
    %v1221 = vunpack.c.l.b16 %v386
    %v1222 = vunpack.c.h.b16 %v386
    %v1223 = vunpack.c.l.b16 %v387
    %v1224 = vunpack.c.h.b16 %v387
    %v1225 = vunpack.c.l.b16 %v388
    %v1226 = vunpack.c.l.b16 %v389
    %v1227 = vunpack.c.h.b16 %v389
    %v1228 = vunpack.c.l.b16 %v390
    %v1229 = vunpack.c.h.b16 %v390
    %v1230 = vunpack.c.l.b16 %v391
    %v1231 = vunpack.c.h.b16 %v391
    %v1232 = vunpack.c.l.b16 %v392
    %v1233 = vunpack.c.h.b16 %v392
    %v1234 = vunpack.c.l.b16 %v393
    %v1235 = vunpack.c.l.b16 %v394
    %v1236 = vunpack.c.h.b16 %v394
    %v1237 = vunpack.c.l.b16 %v395
    %v1238 = vunpack.c.h.b16 %v395
    %v1239 = vunpack.c.l.b16 %v396
    %v1240 = vunpack.c.h.b16 %v396
    %v1241 = vunpack.c.l.b16 %v397
    %v1242 = vunpack.c.h.b16 %v397
    %v1243 = vunpack.c.l.b16 %v398
    %v1244 = vunpack.c.l.b16 %v399
    %v1245 = vunpack.c.h.b16 %v399
    %v1246 = vunpack.c.l.b16 %v400
    %v1247 = vunpack.c.h.b16 %v400
    %v1248 = vunpack.c.l.b16 %v401
    %v1249 = vunpack.c.h.b16 %v401
    %v1250 = vunpack.c.l.b16 %v402
    %v1251 = vunpack.c.h.b16 %v402
    %v1252 = vunpack.c.l.b16 %v403
    %v1253 = vunpack.c.l.b16 %v404
    %v1254 = vunpack.c.h.b16 %v404
    %v1255 = vunpack.c.l.b16 %v405
    %v1256 = vunpack.c.h.b16 %v405
    %v1257 = vunpack.c.l.b16 %v406
    %v1258 = vunpack.c.h.b16 %v406
    %v1259 = vunpack.c.l.b16 %v407
    %v1260 = vunpack.c.h.b16 %v407
    %v1261 = vunpack.c.l.b16 %v408
    %v1262 = vunpack.c.l.b16 %v409
    %v1263 = vunpack.c.h.b16 %v409
    %v1264 = vunpack.c.l.b16 %v410
    %v1265 = vunpack.c.h.b16 %v410
    %v1266 = vunpack.c.l.b16 %v411
    %v1267 = vunpack.c.h.b16 %v411
    %v1268 = vunpack.c.l.b16 %v412
    %v1269 = vunpack.c.h.b16 %v412
    %v1270 = vunpack.c.l.b16 %v413
    %v1271 = vunpack.c.l.b16 %v414
    %v1272 = vunpack.c.h.b16 %v414
    %v1273 = vunpack.c.l.b16 %v415
    %v1274 = vunpack.c.h.b16 %v415
    %v1275 = vunpack.c.l.b16 %v416
    %v1276 = vunpack.c.h.b16 %v416
    %v1277 = vunpack.c.l.b16 %v417
    %v1278 = vunpack.c.h.b16 %v417
    %v1279 = vunpack.c.l.b16 %v418
    %v1280 = vunpack.c.l.b16 %v419
    %v1281 = vunpack.c.h.b16 %v419
    %v1282 = vunpack.c.l.b16 %v420
    %v1283 = vunpack.c.h.b16 %v420
    %v1284 = vunpack.c.l.b16 %v421
    %v1285 = vunpack.c.h.b16 %v421
    %v1286 = vunpack.c.l.b16 %v422
    %v1287 = vunpack.c.h.b16 %v422
    %v1288 = vunpack.c.l.b16 %v423
    %v1289 = vunpack.c.l.b16 %v424
    %v1290 = vunpack.c.h.b16 %v424
    %v1291 = vunpack.c.l.b16 %v425
    %v1292 = vunpack.c.h.b16 %v425
    %v1293 = vunpack.c.l.b16 %v426
    %v1294 = vunpack.c.h.b16 %v426
    %v1295 = vunpack.c.l.b16 %v427
    %v1296 = vunpack.c.h.b16 %v427
    %v1297 = vunpack.c.l.b16 %v428
    %v1298 = vunpack.c.l.b16 %v429
    %v1299 = vunpack.c.h.b16 %v429
    %v1300 = vunpack.c.l.b16 %v430
    %v1301 = vunpack.c.h.b16 %v430
    %v1302 = vunpack.c.l.b16 %v431
    %v1303 = vunpack.c.h.b16 %v431
    %v1304 = vunpack.c.l.b16 %v432
    %v1305 = vunpack.c.h.b16 %v432
    %v1306 = vunpack.c.l.b16 %v433
    %v1307 = vunpack.c.l.b16 %v434
    %v1308 = vunpack.c.h.b16 %v434
    %v1309 = vunpack.c.l.b16 %v435
    %v1310 = vunpack.c.h.b16 %v435
    %v1311 = vunpack.c.l.b16 %v436
    %v1312 = vunpack.c.h.b16 %v436
    %v1313 = vunpack.c.l.b16 %v437
    %v1314 = vunpack.c.h.b16 %v437
    %v1315 = vunpack.c.l.b16 %v438
    %v1316 = vunpack.c.l.b16 %v439
    %v1317 = vunpack.c.h.b16 %v439
    %v1318 = vunpack.c.l.b16 %v440
    %v1319 = vunpack.c.h.b16 %v440
    %v1320 = vunpack.c.l.b16 %v441
    %v1321 = vunpack.c.h.b16 %v441
    %v1322 = vunpack.c.l.b16 %v442
    %v1323 = vunpack.c.h.b16 %v442
    %v1324 = vunpack.c.l.b16 %v443
    %v1325 = vunpack.c.l.b16 %v444
    %v1326 = vunpack.c.h.b16 %v444
    %v1327 = vunpack.c.l.b16 %v445
    %v1328 = vunpack.c.h.b16 %v445
    %v1329 = vunpack.c.l.b16 %v446
    %v1330 = vunpack.c.h.b16 %v446
    %v1331 = vunpack.c.l.b16 %v447
    %v1332 = vunpack.c.h.b16 %v447
    %v1333 = vunpack.c.l.b16 %v448
    %v1334 = vunpack.c.l.b16 %v449
    %v1335 = vunpack.c.h.b16 %v449
    %v1336 = vunpack.c.l.b16 %v450
    %v1337 = vunpack.c.h.b16 %v450
    %v1338 = vunpack.c.l.b16 %v451
    %v1339 = vunpack.c.h.b16 %v451
    %v1340 = vunpack.c.l.b16 %v452
    %v1341 = vunpack.c.h.b16 %v452
    %v1342 = vunpack.c.l.b16 %v453
    %v1343 = vunpack.c.l.b16 %v454
    %v1344 = vunpack.c.h.b16 %v454
    %v1345 = vunpack.c.l.b16 %v455
    %v1346 = vunpack.c.h.b16 %v455
    %v1347 = vunpack.c.l.b16 %v456
    %v1348 = vunpack.c.h.b16 %v456
    %v1349 = vunpack.c.l.b16 %v457
    %v1350 = vunpack.c.h.b16 %v457
    %v1351 = vunpack.c.l.b16 %v458
    %v1352 = vunpack.c.l.b16 %v459
    %v1353 = vunpack.c.h.b16 %v459
    %v1354 = vunpack.c.l.b16 %v460
    %v1355 = vunpack.c.h.b16 %v460
    %v1356 = vunpack.c.l.b16 %v461
    %v1357 = vunpack.c.h.b16 %v461
    %v1358 = vunpack.c.l.b16 %v462
    %v1359 = vunpack.c.h.b16 %v462
    %v1360 = vunpack.c.l.b16 %v463
    %v1361 = vunpack.c.l.b16 %v464
    %v1362 = vunpack.c.h.b16 %v464
    %v1363 = vunpack.c.l.b16 %v465
    %v1364 = vunpack.c.h.b16 %v465
    %v1365 = vunpack.c.l.b16 %v466
    %v1366 = vunpack.c.h.b16 %v466
    %v1367 = vunpack.c.l.b16 %v467
    %v1368 = vunpack.c.h.b16 %v467
    %v1369 = vunpack.c.l.b16 %v468
    %v1370 = vunpack.c.l.b16 %v469
    %v1371 = vunpack.c.h.b16 %v469
    %v1372 = vunpack.c.l.b16 %v470
    %v1373 = vunpack.c.h.b16 %v470
    %v1374 = vunpack.c.l.b16 %v471
    %v1375 = vunpack.c.h.b16 %v471
    %v1376 = vunpack.c.l.b16 %v472
    %v1377 = vunpack.c.h.b16 %v472
    %v1378 = vunpack.c.l.b16 %v473
    %v1379 = vunpack.c.l.b16 %v474
    %v1380 = vunpack.c.h.b16 %v474
    %v1381 = vunpack.c.l.b16 %v475
    %v1382 = vunpack.c.h.b16 %v475
    %v1383 = vunpack.c.l.b16 %v476
    %v1384 = vunpack.c.h.b16 %v476
    %v1385 = vunpack.c.l.b16 %v477
    %v1386 = vunpack.c.h.b16 %v477
    %v1387 = vunpack.c.l.b16 %v478
    %v1388 = vunpack.c.l.b16 %v479
    %v1389 = vunpack.c.h.b16 %v479
    %v1390 = vunpack.c.l.b16 %v480
    %v1391 = vunpack.c.h.b16 %v480
    %v1392 = vunpack.c.l.b16 %v481
    %v1393 = vunpack.c.h.b16 %v481
    %v1394 = vunpack.c.l.b16 %v482
    %v1395 = vunpack.c.h.b16 %v482
    %v1396 = vunpack.c.l.b16 %v483
    %v1397 = vunpack.c.l.b16 %v484
    %v1398 = vunpack.c.h.b16 %v484
    %v1399 = vunpack.c.l.b16 %v485
    %v1400 = vunpack.c.h.b16 %v485
    %v1401 = vunpack.c.l.b16 %v486
    %v1402 = vunpack.c.h.b16 %v486
    %v1403 = vunpack.c.l.b16 %v487
    %v1404 = vunpack.c.h.b16 %v487
    %v1405 = vunpack.c.l.b16 %v488
    %v1406 = vunpack.c.l.b16 %v489
    %v1407 = vunpack.c.h.b16 %v489
    %v1408 = vunpack.c.l.b16 %v490
    %v1409 = vunpack.c.h.b16 %v490
    %v1410 = vunpack.c.l.b16 %v491
    %v1411 = vunpack.c.h.b16 %v491
    %v1412 = vunpack.c.l.b16 %v492
    %v1413 = vunpack.c.h.b16 %v492
    %v1414 = vunpack.c.l.b16 %v493
    %v1415 = vunpack.c.l.b16 %v494
    %v1416 = vunpack.c.h.b16 %v494
    %v1417 = vunpack.c.l.b16 %v495
    %v1418 = vunpack.c.h.b16 %v495
    %v1419 = vunpack.c.l.b16 %v496
    %v1420 = vunpack.c.h.b16 %v496
    %v1421 = vunpack.c.l.b16 %v497
    %v1422 = vunpack.c.h.b16 %v497
    %v1423 = vunpack.c.l.b16 %v498
    %v1424 = vunpack.c.l.b16 %v499
    %v1425 = vunpack.c.h.b16 %v499
    %v1426 = vunpack.c.l.b16 %v500
    %v1427 = vunpack.c.h.b16 %v500
    %v1428 = vunpack.c.l.b16 %v501
    %v1429 = vunpack.c.h.b16 %v501
    %v1430 = vunpack.c.l.b16 %v502
    %v1431 = vunpack.c.h.b16 %v502
    %v1432 = vunpack.c.l.b16 %v503
    %v1433 = vunpack.c.l.b16 %v504
    %v1434 = vunpack.c.h.b16 %v504
    %v1435 = vunpack.c.l.b16 %v505
    %v1436 = vunpack.c.h.b16 %v505
    %v1437 = vunpack.c.l.b16 %v506
    %v1438 = vunpack.c.h.b16 %v506
    %v1439 = vunpack.c.l.b16 %v507
    %v1440 = vunpack.c.h.b16 %v507
    %v1441 = vunpack.c.l.b16 %v508
    %v1442 = vunpack.c.l.b16 %v509
    %v1443 = vunpack.c.h.b16 %v509
    %v1444 = vunpack.c.l.b16 %v510
    %v1445 = vunpack.c.h.b16 %v510
    %v1446 = vunpack.c.l.b16 %v511
    %v1447 = vunpack.c.h.b16 %v511
    %v1448 = vunpack.c.l.b16 %v512
    %v1449 = vunpack.c.h.b16 %v512
    %v1450 = vunpack.c.l.b16 %v513
    %v1451 = vunpack.c.l.b16 %v514
    %v1452 = vunpack.c.h.b16 %v514
    %v1453 = vunpack.c.l.b16 %v515
    %v1454 = vunpack.c.h.b16 %v515
    %v1455 = vunpack.c.l.b16 %v516
    %v1456 = vunpack.c.h.b16 %v516
    %v1457 = vunpack.c.l.b16 %v517
    %v1458 = vunpack.c.h.b16 %v517
    %v1459 = vunpack.c.l.b16 %v518
    %v1460 = vunpack.c.l.b16 %v519
    %v1461 = vunpack.c.h.b16 %v519
    %v1462 = vunpack.c.l.b16 %v520
    %v1463 = vunpack.c.h.b16 %v520
    %v1464 = vunpack.c.l.b16 %v521
    %v1465 = vunpack.c.h.b16 %v521
    %v1466 = vunpack.c.l.b16 %v522
    %v1467 = vunpack.c.h.b16 %v522
    %v1468 = vunpack.c.l.b16 %v523
    %v1469 = vpack.c.b16 %v902, %v893
    %v1470 = vpack.c.b16 %v903, %v894
    %v1471 = vpack.c.b16 %v904, %v895
    %v1472 = vpack.c.b16 %v905, %v896
    %v1473 = vpack.c.b16 %v906, %v897
    %v1474 = vpack.c.b16 %v907, %v898
    %v1475 = vpack.c.b16 %v908, %v899
    %v1476 = vpack.c.b16 %v909, %v900
    %v1477 = vpack.c.b16 %v910, %v901
    %v1478 = vpack.c.b16 %v920, %v911
    %v1479 = vpack.c.b16 %v921, %v912
    %v1480 = vpack.c.b16 %v922, %v913
    %v1481 = vpack.c.b16 %v923, %v914
    %v1482 = vpack.c.b16 %v924, %v915
    %v1483 = vpack.c.b16 %v925, %v916
    %v1484 = vpack.c.b16 %v926, %v917
    %v1485 = vpack.c.b16 %v927, %v918
    %v1486 = vpack.c.b16 %v928, %v919
    %v1487 = vpack.c.b16 %v938, %v929
    %v1488 = vpack.c.b16 %v939, %v930
    %v1489 = vpack.c.b16 %v940, %v931
    %v1490 = vpack.c.b16 %v941, %v932
    %v1491 = vpack.c.b16 %v942, %v933
    %v1492 = vpack.c.b16 %v943, %v934
    %v1493 = vpack.c.b16 %v944, %v935
    %v1494 = vpack.c.b16 %v945, %v936
    %v1495 = vpack.c.b16 %v946, %v937
    %v1496 = vpack.c.b16 %v956, %v947
    %v1497 = vpack.c.b16 %v957, %v948
    %v1498 = vpack.c.b16 %v958, %v949
    %v1499 = vpack.c.b16 %v959, %v950
    %v1500 = vpack.c.b16 %v960, %v951
    %v1501 = vpack.c.b16 %v961, %v952
    %v1502 = vpack.c.b16 %v962, %v953
    %v1503 = vpack.c.b16 %v963, %v954
    %v1504 = vpack.c.b16 %v964, %v955
    %v1505 = vpack.c.b16 %v974, %v965
    %v1506 = vpack.c.b16 %v975, %v966
    %v1507 = vpack.c.b16 %v976, %v967
    %v1508 = vpack.c.b16 %v977, %v968
    %v1509 = vpack.c.b16 %v978, %v969
    %v1510 = vpack.c.b16 %v979, %v970
    %v1511 = vpack.c.b16 %v980, %v971
    %v1512 = vpack.c.b16 %v981, %v972
    %v1513 = vpack.c.b16 %v982, %v973
    %v1514 = vpack.c.b16 %v992, %v983
    %v1515 = vpack.c.b16 %v993, %v984
    %v1516 = vpack.c.b16 %v994, %v985
    %v1517 = vpack.c.b16 %v995, %v986
    %v1518 = vpack.c.b16 %v996, %v987
    %v1519 = vpack.c.b16 %v997, %v988
    %v1520 = vpack.c.b16 %v998, %v989
    %v1521 = vpack.c.b16 %v999, %v990
    %v1522 = vpack.c.b16 %v1000, %v991
    %v1523 = vpack.c.b16 %v1010, %v1001
    %v1524 = vpack.c.b16 %v1011, %v1002
    %v1525 = vpack.c.b16 %v1012, %v1003
    %v1526 = vpack.c.b16 %v1013, %v1004
    %v1527 = vpack.c.b16 %v1014, %v1005
    %v1528 = vpack.c.b16 %v1015, %v1006
    %v1529 = vpack.c.b16 %v1016, %v1007
    %v1530 = vpack.c.b16 %v1017, %v1008
    %v1531 = vpack.c.b16 %v1018, %v1009
    %v1532 = vpack.c.b16 %v1028, %v1019
    %v1533 = vpack.c.b16 %v1029, %v1020
    %v1534 = vpack.c.b16 %v1030, %v1021
    %v1535 = vpack.c.b16 %v1031, %v1022
    %v1536 = vpack.c.b16 %v1032, %v1023
    %v1537 = vpack.c.b16 %v1033, %v1024
    %v1538 = vpack.c.b16 %v1034, %v1025
    %v1539 = vpack.c.b16 %v1035, %v1026
    %v1540 = vpack.c.b16 %v1036, %v1027
    %v1541 = vpack.c.b16 %v1046, %v1037
    %v1542 = vpack.c.b16 %v1047, %v1038
    %v1543 = vpack.c.b16 %v1048, %v1039
    %v1544 = vpack.c.b16 %v1049, %v1040
    %v1545 = vpack.c.b16 %v1050, %v1041
    %v1546 = vpack.c.b16 %v1051, %v1042
    %v1547 = vpack.c.b16 %v1052, %v1043
    %v1548 = vpack.c.b16 %v1053, %v1044
    %v1549 = vpack.c.b16 %v1054, %v1045
    %v1550 = vpack.c.b16 %v1064, %v1055
    %v1551 = vpack.c.b16 %v1065, %v1056
    %v1552 = vpack.c.b16 %v1066, %v1057
    %v1553 = vpack.c.b16 %v1067, %v1058
    %v1554 = vpack.c.b16 %v1068, %v1059
    %v1555 = vpack.c.b16 %v1069, %v1060
    %v1556 = vpack.c.b16 %v1070, %v1061
    %v1557 = vpack.c.b16 %v1071, %v1062
    %v1558 = vpack.c.b16 %v1072, %v1063
    %v1559 = vpack.c.b16 %v1082, %v1073
    %v1560 = vpack.c.b16 %v1083, %v1074
    %v1561 = vpack.c.b16 %v1084, %v1075
    %v1562 = vpack.c.b16 %v1085, %v1076
    %v1563 = vpack.c.b16 %v1086, %v1077
    %v1564 = vpack.c.b16 %v1087, %v1078
    %v1565 = vpack.c.b16 %v1088, %v1079
    %v1566 = vpack.c.b16 %v1089, %v1080
    %v1567 = vpack.c.b16 %v1090, %v1081
    %v1568 = vpack.c.b16 %v1100, %v1091
    %v1569 = vpack.c.b16 %v1101, %v1092
    %v1570 = vpack.c.b16 %v1102, %v1093
    %v1571 = vpack.c.b16 %v1103, %v1094
    %v1572 = vpack.c.b16 %v1104, %v1095
    %v1573 = vpack.c.b16 %v1105, %v1096
    %v1574 = vpack.c.b16 %v1106, %v1097
    %v1575 = vpack.c.b16 %v1107, %v1098
    %v1576 = vpack.c.b16 %v1108, %v1099
    %v1577 = vpack.c.b16 %v1118, %v1109
    %v1578 = vpack.c.b16 %v1119, %v1110
    %v1579 = vpack.c.b16 %v1120, %v1111
    %v1580 = vpack.c.b16 %v1121, %v1112
    %v1581 = vpack.c.b16 %v1122, %v1113
    %v1582 = vpack.c.b16 %v1123, %v1114
    %v1583 = vpack.c.b16 %v1124, %v1115
    %v1584 = vpack.c.b16 %v1125, %v1116
    %v1585 = vpack.c.b16 %v1126, %v1117
    %v1586 = vpack.c.b16 %v1136, %v1127
    %v1587 = vpack.c.b16 %v1137, %v1128
    %v1588 = vpack.c.b16 %v1138, %v1129
    %v1589 = vpack.c.b16 %v1139, %v1130
    %v1590 = vpack.c.b16 %v1140, %v1131
    %v1591 = vpack.c.b16 %v1141, %v1132
    %v1592 = vpack.c.b16 %v1142, %v1133
    %v1593 = vpack.c.b16 %v1143, %v1134
    %v1594 = vpack.c.b16 %v1144, %v1135
    %v1595 = vpack.c.b16 %v1154, %v1145
    %v1596 = vpack.c.b16 %v1155, %v1146
    %v1597 = vpack.c.b16 %v1156, %v1147
    %v1598 = vpack.c.b16 %v1157, %v1148
    %v1599 = vpack.c.b16 %v1158, %v1149
    %v1600 = vpack.c.b16 %v1159, %v1150
    %v1601 = vpack.c.b16 %v1160, %v1151
    %v1602 = vpack.c.b16 %v1161, %v1152
    %v1603 = vpack.c.b16 %v1162, %v1153
    %v1604 = vpack.c.b16 %v1172, %v1163
    %v1605 = vpack.c.b16 %v1173, %v1164
    %v1606 = vpack.c.b16 %v1174, %v1165
    %v1607 = vpack.c.b16 %v1175, %v1166
    %v1608 = vpack.c.b16 %v1176, %v1167
    %v1609 = vpack.c.b16 %v1177, %v1168
    %v1610 = vpack.c.b16 %v1178, %v1169
    %v1611 = vpack.c.b16 %v1179, %v1170
    %v1612 = vpack.c.b16 %v1180, %v1171
    %v1613 = vpack.c.b16 %v1190, %v1181
    %v1614 = vpack.c.b16 %v1191, %v1182
    %v1615 = vpack.c.b16 %v1192, %v1183
    %v1616 = vpack.c.b16 %v1193, %v1184
    %v1617 = vpack.c.b16 %v1194, %v1185
    %v1618 = vpack.c.b16 %v1195, %v1186
    %v1619 = vpack.c.b16 %v1196, %v1187
    %v1620 = vpack.c.b16 %v1197, %v1188
    %v1621 = vpack.c.b16 %v1198, %v1189
    %v1622 = vpack.c.b16 %v1208, %v1199
    %v1623 = vpack.c.b16 %v1209, %v1200
    %v1624 = vpack.c.b16 %v1210, %v1201
    %v1625 = vpack.c.b16 %v1211, %v1202
    %v1626 = vpack.c.b16 %v1212, %v1203
    %v1627 = vpack.c.b16 %v1213, %v1204
    %v1628 = vpack.c.b16 %v1214, %v1205
    %v1629 = vpack.c.b16 %v1215, %v1206
    %v1630 = vpack.c.b16 %v1216, %v1207
    %v1631 = vpack.c.b16 %v1226, %v1217
    %v1632 = vpack.c.b16 %v1227, %v1218
    %v1633 = vpack.c.b16 %v1228, %v1219
    %v1634 = vpack.c.b16 %v1229, %v1220
    %v1635 = vpack.c.b16 %v1230, %v1221
    %v1636 = vpack.c.b16 %v1231, %v1222
    %v1637 = vpack.c.b16 %v1232, %v1223
    %v1638 = vpack.c.b16 %v1233, %v1224
    %v1639 = vpack.c.b16 %v1234, %v1225
    %v1640 = vpack.c.b16 %v1244, %v1235
    %v1641 = vpack.c.b16 %v1245, %v1236
    %v1642 = vpack.c.b16 %v1246, %v1237
    %v1643 = vpack.c.b16 %v1247, %v1238
    %v1644 = vpack.c.b16 %v1248, %v1239
    %v1645 = vpack.c.b16 %v1249, %v1240
    %v1646 = vpack.c.b16 %v1250, %v1241
    %v1647 = vpack.c.b16 %v1251, %v1242
    %v1648 = vpack.c.b16 %v1252, %v1243
    %v1649 = vpack.c.b16 %v1262, %v1253
    %v1650 = vpack.c.b16 %v1263, %v1254
    %v1651 = vpack.c.b16 %v1264, %v1255
    %v1652 = vpack.c.b16 %v1265, %v1256
    %v1653 = vpack.c.b16 %v1266, %v1257
    %v1654 = vpack.c.b16 %v1267, %v1258
    %v1655 = vpack.c.b16 %v1268, %v1259
    %v1656 = vpack.c.b16 %v1269, %v1260
    %v1657 = vpack.c.b16 %v1270, %v1261
    %v1658 = vpack.c.b16 %v1280, %v1271
    %v1659 = vpack.c.b16 %v1281, %v1272
    %v1660 = vpack.c.b16 %v1282, %v1273
    %v1661 = vpack.c.b16 %v1283, %v1274
    %v1662 = vpack.c.b16 %v1284, %v1275
    %v1663 = vpack.c.b16 %v1285, %v1276
    %v1664 = vpack.c.b16 %v1286, %v1277
    %v1665 = vpack.c.b16 %v1287, %v1278
    %v1666 = vpack.c.b16 %v1288, %v1279
    %v1667 = vpack.c.b16 %v1298, %v1289
    %v1668 = vpack.c.b16 %v1299, %v1290
    %v1669 = vpack.c.b16 %v1300, %v1291
    %v1670 = vpack.c.b16 %v1301, %v1292
    %v1671 = vpack.c.b16 %v1302, %v1293
    %v1672 = vpack.c.b16 %v1303, %v1294
    %v1673 = vpack.c.b16 %v1304, %v1295
    %v1674 = vpack.c.b16 %v1305, %v1296
    %v1675 = vpack.c.b16 %v1306, %v1297
    %v1676 = vpack.c.b16 %v1316, %v1307
    %v1677 = vpack.c.b16 %v1317, %v1308
    %v1678 = vpack.c.b16 %v1318, %v1309
    %v1679 = vpack.c.b16 %v1319, %v1310
    %v1680 = vpack.c.b16 %v1320, %v1311
    %v1681 = vpack.c.b16 %v1321, %v1312
    %v1682 = vpack.c.b16 %v1322, %v1313
    %v1683 = vpack.c.b16 %v1323, %v1314
    %v1684 = vpack.c.b16 %v1324, %v1315
    %v1685 = vpack.c.b16 %v1334, %v1325
    %v1686 = vpack.c.b16 %v1335, %v1326
    %v1687 = vpack.c.b16 %v1336, %v1327
    %v1688 = vpack.c.b16 %v1337, %v1328
    %v1689 = vpack.c.b16 %v1338, %v1329
    %v1690 = vpack.c.b16 %v1339, %v1330
    %v1691 = vpack.c.b16 %v1340, %v1331
    %v1692 = vpack.c.b16 %v1341, %v1332
    %v1693 = vpack.c.b16 %v1342, %v1333
    %v1694 = vpack.c.b16 %v1352, %v1343
    %v1695 = vpack.c.b16 %v1353, %v1344
    %v1696 = vpack.c.b16 %v1354, %v1345
    %v1697 = vpack.c.b16 %v1355, %v1346
    %v1698 = vpack.c.b16 %v1356, %v1347
    %v1699 = vpack.c.b16 %v1357, %v1348
    %v1700 = vpack.c.b16 %v1358, %v1349
    %v1701 = vpack.c.b16 %v1359, %v1350
    %v1702 = vpack.c.b16 %v1360, %v1351
    %v1703 = vpack.c.b16 %v1370, %v1361
    %v1704 = vpack.c.b16 %v1371, %v1362
    %v1705 = vpack.c.b16 %v1372, %v1363
    %v1706 = vpack.c.b16 %v1373, %v1364
    %v1707 = vpack.c.b16 %v1374, %v1365
    %v1708 = vpack.c.b16 %v1375, %v1366
    %v1709 = vpack.c.b16 %v1376, %v1367
    %v1710 = vpack.c.b16 %v1377, %v1368
    %v1711 = vpack.c.b16 %v1378, %v1369
    %v1712 = vpack.c.b16 %v1388, %v1379
    %v1713 = vpack.c.b16 %v1389, %v1380
    %v1714 = vpack.c.b16 %v1390, %v1381
    %v1715 = vpack.c.b16 %v1391, %v1382
    %v1716 = vpack.c.b16 %v1392, %v1383
    %v1717 = vpack.c.b16 %v1393, %v1384
    %v1718 = vpack.c.b16 %v1394, %v1385
    %v1719 = vpack.c.b16 %v1395, %v1386
    %v1720 = vpack.c.b16 %v1396, %v1387
    %v1721 = vpack.c.b16 %v1406, %v1397
    %v1722 = vpack.c.b16 %v1407, %v1398
    %v1723 = vpack.c.b16 %v1408, %v1399
    %v1724 = vpack.c.b16 %v1409, %v1400
    %v1725 = vpack.c.b16 %v1410, %v1401
    %v1726 = vpack.c.b16 %v1411, %v1402
    %v1727 = vpack.c.b16 %v1412, %v1403
    %v1728 = vpack.c.b16 %v1413, %v1404
    %v1729 = vpack.c.b16 %v1414, %v1405
    %v1730 = vpack.c.b16 %v1424, %v1415
    %v1731 = vpack.c.b16 %v1425, %v1416
    %v1732 = vpack.c.b16 %v1426, %v1417
    %v1733 = vpack.c.b16 %v1427, %v1418
    %v1734 = vpack.c.b16 %v1428, %v1419
    %v1735 = vpack.c.b16 %v1429, %v1420
    %v1736 = vpack.c.b16 %v1430, %v1421
    %v1737 = vpack.c.b16 %v1431, %v1422
    %v1738 = vpack.c.b16 %v1432, %v1423
    %v1739 = vpack.c.b16 %v1442, %v1433
    %v1740 = vpack.c.b16 %v1443, %v1434
    %v1741 = vpack.c.b16 %v1444, %v1435
    %v1742 = vpack.c.b16 %v1445, %v1436
    %v1743 = vpack.c.b16 %v1446, %v1437
    %v1744 = vpack.c.b16 %v1447, %v1438
    %v1745 = vpack.c.b16 %v1448, %v1439
    %v1746 = vpack.c.b16 %v1449, %v1440
    %v1747 = vpack.c.b16 %v1450, %v1441
    %v1748 = vpack.c.b16 %v1460, %v1451
    %v1749 = vpack.c.b16 %v1461, %v1452
    %v1750 = vpack.c.b16 %v1462, %v1453
    %v1751 = vpack.c.b16 %v1463, %v1454
    %v1752 = vpack.c.b16 %v1464, %v1455
    %v1753 = vpack.c.b16 %v1465, %v1456
    %v1754 = vpack.c.b16 %v1466, %v1457
    %v1755 = vpack.c.b16 %v1467, %v1458
    %v1756 = vpack.c.b16 %v1468, %v1459
    %2045 = vmatprep.subr.bf16.mxu0 %v1470
    %2046 = vmatpush1.bf16.msra.mxu0 %v1469
    %2047 = vmatprep.subr.bf16.mxu0 %v1479
    %2048 = vmatpush1.bf16.msra.mxu0 %v1478
    %2049 = vmatprep.subr.bf16.mxu0 %v1488
    %2050 = vmatpush1.bf16.msra.mxu0 %v1487
    %2051 = vmatprep.subr.bf16.mxu0 %v1497
    %2052 = vmatpush1.bf16.msra.mxu0 %v1496
    %2053 = vmatprep.subr.bf16.mxu0 %v1506
    %2054 = vmatpush1.bf16.msra.mxu0 %v1505
    %2055 = vmatprep.subr.bf16.mxu0 %v1515
    %2056 = vmatpush1.bf16.msra.mxu0 %v1514
    %2057 = vmatprep.subr.bf16.mxu0 %v1524
    %2058 = vmatpush1.bf16.msra.mxu0 %v1523
    %2059 = vmatprep.subr.bf16.mxu0 %v1533
    %2060 = vmatpush1.bf16.msra.mxu0 %v1532
    %2061 = vmatprep.subr.bf16.mxu0 %v1542
    %2062 = vmatpush1.bf16.msra.mxu0 %v1541
    %2063 = vmatprep.subr.bf16.mxu0 %v1551
    %2064 = vmatpush1.bf16.msra.mxu0 %v1550
    %2065 = vmatprep.subr.bf16.mxu0 %v1560
    %2066 = vmatpush1.bf16.msra.mxu0 %v1559
    %2067 = vmatprep.subr.bf16.mxu0 %v1569
    %2068 = vmatpush1.bf16.msra.mxu0 %v1568
    %2069 = vmatprep.subr.bf16.mxu0 %v1578
    %2070 = vmatpush1.bf16.msra.mxu0 %v1577
    %2071 = vmatprep.subr.bf16.mxu0 %v1587
    %2072 = vmatpush1.bf16.msra.mxu0 %v1586
    %2073 = vmatprep.subr.bf16.mxu0 %v1596
    %2074 = vmatpush1.bf16.msra.mxu0 %v1595
    %2075 = vmatprep.subr.bf16.mxu0 %v1605
    %2076 = vmatpush1.bf16.msra.mxu0 %v1604
    %2077 = vmatprep.mubr.bf16.mxu0 %v183
    %2078 = vmatmul.mubr.bf16.gmra.mrb[0].mxu0 %v176
    %v2079 = vpop.f32.mrb[0].mxu0
    %v2080 = vadd.f32 %v531, %v2079
    %v2081 = vpop.f32.mrb[0].mxu0
    %v2082 = vadd.f32 %v535, %v2081
    %v2083 = vpop.f32.mrb[0].mxu0
    %v2084 = vadd.f32 %v531, %v2083
    %v2085 = vpop.f32.mrb[0].mxu0
    %v2086 = vadd.f32 %v535, %v2085
    %2087 = vmatprep.mubr.bf16.mxu0 %v187
    %2088 = vmatmul.mubr.bf16.gmra.mrb[0].mxu0 %v179
    %v2089 = vpop.f32.mrb[0].mxu0
    %v2090 = vadd.f32 %v531, %v2089
    %v2091 = vpop.f32.mrb[0].mxu0
    %v2092 = vadd.f32 %v535, %v2091
    %v2093 = vpop.f32.mrb[0].mxu0
    %v2094 = vadd.f32 %v531, %v2093
    %v2095 = vpop.f32.mrb[0].mxu0
    %v2096 = vadd.f32 %v535, %v2095
    %2097 = vdwg.mxu0
    %2098 = vmatprep.subr.bf16.mxu0 %v1614
    %2099 = vmatpush1.bf16.msra.mxu0 %v1613
    %2100 = vmatprep.subr.bf16.mxu0 %v1623
    %2101 = vmatpush1.bf16.msra.mxu0 %v1622
    %2102 = vmatprep.subr.bf16.mxu0 %v1632
    %2103 = vmatpush1.bf16.msra.mxu0 %v1631
    %2104 = vmatprep.subr.bf16.mxu0 %v1641
    %2105 = vmatpush1.bf16.msra.mxu0 %v1640
    %2106 = vmatprep.subr.bf16.mxu0 %v1650
    %2107 = vmatpush1.bf16.msra.mxu0 %v1649
    %2108 = vmatprep.subr.bf16.mxu0 %v1659
    %2109 = vmatpush1.bf16.msra.mxu0 %v1658
    %2110 = vmatprep.subr.bf16.mxu0 %v1668
    %2111 = vmatpush1.bf16.msra.mxu0 %v1667
    %2112 = vmatprep.subr.bf16.mxu0 %v1677
    %2113 = vmatpush1.bf16.msra.mxu0 %v1676
    %2114 = vmatprep.subr.bf16.mxu0 %v1686
    %2115 = vmatpush1.bf16.msra.mxu0 %v1685
    %2116 = vmatprep.subr.bf16.mxu0 %v1695
    %2117 = vmatpush1.bf16.msra.mxu0 %v1694
    %2118 = vmatprep.subr.bf16.mxu0 %v1704
    %2119 = vmatpush1.bf16.msra.mxu0 %v1703
    %2120 = vmatprep.subr.bf16.mxu0 %v1713
    %2121 = vmatpush1.bf16.msra.mxu0 %v1712
    %2122 = vmatprep.subr.bf16.mxu0 %v1722
    %2123 = vmatpush1.bf16.msra.mxu0 %v1721
    %2124 = vmatprep.subr.bf16.mxu0 %v1731
    %2125 = vmatpush1.bf16.msra.mxu0 %v1730
    %2126 = vmatprep.subr.bf16.mxu0 %v1740
    %2127 = vmatpush1.bf16.msra.mxu0 %v1739
    %2128 = vmatprep.subr.bf16.mxu0 %v1749
    %2129 = vmatpush1.bf16.msra.mxu0 %v1748
    %2130 = vmatprep.mubr.bf16.mxu0 %v199
    %2131 = vmatmul.mubr.bf16.gmra.mrb[0].mxu0 %v191
    %v2132 = vpop.f32.mrb[0].mxu0
    %v2133 = vadd.f32 %v2080, %v2132
    %v2134 = vpop.f32.mrb[0].mxu0
    %v2135 = vadd.f32 %v2082, %v2134
    %v2136 = vpop.f32.mrb[0].mxu0
    %v2137 = vadd.f32 %v2084, %v2136
    %v2138 = vpop.f32.mrb[0].mxu0
    %v2139 = vadd.f32 %v2086, %v2138
    %2140 = vmatprep.mubr.bf16.mxu0 %v202
    %2141 = vmatmul.mubr.bf16.gmra.mrb[0].mxu0 %v195
    %v2142 = vpop.f32.mrb[0].mxu0
    %v2143 = vadd.f32 %v2090, %v2142
    %v2144 = vpop.f32.mrb[0].mxu0
    %v2145 = vadd.f32 %v2092, %v2144
    %v2146 = vpop.f32.mrb[0].mxu0
    %v2147 = vadd.f32 %v2094, %v2146
    %v2148 = vpop.f32.mrb[0].mxu0
    %v2149 = vadd.f32 %v2096, %v2148
    %2150 = vdwg.mxu0
    %2151 = vmatprep.subr.bf16.mxu0 %v1472
    %2152 = vmatpush1.bf16.msra.mxu0 %v1471
    %2153 = vmatprep.subr.bf16.mxu0 %v1481
    %2154 = vmatpush1.bf16.msra.mxu0 %v1480
    %2155 = vmatprep.subr.bf16.mxu0 %v1490
    %2156 = vmatpush1.bf16.msra.mxu0 %v1489
    %2157 = vmatprep.subr.bf16.mxu0 %v1499
    %2158 = vmatpush1.bf16.msra.mxu0 %v1498
    %2159 = vmatprep.subr.bf16.mxu0 %v1508
    %2160 = vmatpush1.bf16.msra.mxu0 %v1507
    %2161 = vmatprep.subr.bf16.mxu0 %v1517
    %2162 = vmatpush1.bf16.msra.mxu0 %v1516
    %2163 = vmatprep.subr.bf16.mxu0 %v1526
    %2164 = vmatpush1.bf16.msra.mxu0 %v1525
    %2165 = vmatprep.subr.bf16.mxu0 %v1535
    %2166 = vmatpush1.bf16.msra.mxu0 %v1534
    %2167 = vmatprep.subr.bf16.mxu0 %v1544
    %2168 = vmatpush1.bf16.msra.mxu0 %v1543
    %2169 = vmatprep.subr.bf16.mxu0 %v1553
    %2170 = vmatpush1.bf16.msra.mxu0 %v1552
    %2171 = vmatprep.subr.bf16.mxu0 %v1562
    %2172 = vmatpush1.bf16.msra.mxu0 %v1561
    %2173 = vmatprep.subr.bf16.mxu0 %v1571
    %2174 = vmatpush1.bf16.msra.mxu0 %v1570
    %2175 = vmatprep.subr.bf16.mxu0 %v1580
    %2176 = vmatpush1.bf16.msra.mxu0 %v1579
    %2177 = vmatprep.subr.bf16.mxu0 %v1589
    %2178 = vmatpush1.bf16.msra.mxu0 %v1588
    %2179 = vmatprep.subr.bf16.mxu0 %v1598
    %2180 = vmatpush1.bf16.msra.mxu0 %v1597
    %2181 = vmatprep.subr.bf16.mxu0 %v1607
    %2182 = vmatpush1.bf16.msra.mxu0 %v1606
    %2183 = vmatprep.mubr.bf16.mxu0 %v183
    %2184 = vmatmul.mubr.bf16.gmra.mrb[0].mxu0 %v176
    %v2185 = vpop.f32.mrb[0].mxu0
    %v2186 = vadd.f32 %v539, %v2185
    %v2187 = vpop.f32.mrb[0].mxu0
    %v2188 = vadd.f32 %v543, %v2187
    %v2189 = vpop.f32.mrb[0].mxu0
    %v2190 = vadd.f32 %v539, %v2189
    %v2191 = vpop.f32.mrb[0].mxu0
    %v2192 = vadd.f32 %v543, %v2191
    %2193 = vmatprep.mubr.bf16.mxu0 %v187
    %2194 = vmatmul.mubr.bf16.gmra.mrb[0].mxu0 %v179
    %v2195 = vpop.f32.mrb[0].mxu0
    %v2196 = vadd.f32 %v539, %v2195
    %v2197 = vpop.f32.mrb[0].mxu0
    %v2198 = vadd.f32 %v543, %v2197
    %v2199 = vpop.f32.mrb[0].mxu0
    %v2200 = vadd.f32 %v539, %v2199
    %v2201 = vpop.f32.mrb[0].mxu0
    %v2202 = vadd.f32 %v543, %v2201
    %2203 = vdwg.mxu0
    %2204 = vmatprep.subr.bf16.mxu0 %v1616
    %2205 = vmatpush1.bf16.msra.mxu0 %v1615
    %2206 = vmatprep.subr.bf16.mxu0 %v1625
    %2207 = vmatpush1.bf16.msra.mxu0 %v1624
    %2208 = vmatprep.subr.bf16.mxu0 %v1634
    %2209 = vmatpush1.bf16.msra.mxu0 %v1633
    %2210 = vmatprep.subr.bf16.mxu0 %v1643
    %2211 = vmatpush1.bf16.msra.mxu0 %v1642
    %2212 = vmatprep.subr.bf16.mxu0 %v1652
    %2213 = vmatpush1.bf16.msra.mxu0 %v1651
    %2214 = vmatprep.subr.bf16.mxu0 %v1661
    %2215 = vmatpush1.bf16.msra.mxu0 %v1660
    %2216 = vmatprep.subr.bf16.mxu0 %v1670
    %2217 = vmatpush1.bf16.msra.mxu0 %v1669
    %2218 = vmatprep.subr.bf16.mxu0 %v1679
    %2219 = vmatpush1.bf16.msra.mxu0 %v1678
    %2220 = vmatprep.subr.bf16.mxu0 %v1688
    %2221 = vmatpush1.bf16.msra.mxu0 %v1687
    %2222 = vmatprep.subr.bf16.mxu0 %v1697
    %2223 = vmatpush1.bf16.msra.mxu0 %v1696
    %2224 = vmatprep.subr.bf16.mxu0 %v1706
    %2225 = vmatpush1.bf16.msra.mxu0 %v1705
    %2226 = vmatprep.subr.bf16.mxu0 %v1715
    %2227 = vmatpush1.bf16.msra.mxu0 %v1714
    %2228 = vmatprep.subr.bf16.mxu0 %v1724
    %2229 = vmatpush1.bf16.msra.mxu0 %v1723
    %2230 = vmatprep.subr.bf16.mxu0 %v1733
    %2231 = vmatpush1.bf16.msra.mxu0 %v1732
    %2232 = vmatprep.subr.bf16.mxu0 %v1742
    %2233 = vmatpush1.bf16.msra.mxu0 %v1741
    %2234 = vmatprep.subr.bf16.mxu0 %v1751
    %2235 = vmatpush1.bf16.msra.mxu0 %v1750
    %2236 = vmatprep.mubr.bf16.mxu0 %v199
    %2237 = vmatmul.mubr.bf16.gmra.mrb[0].mxu0 %v191
    %v2238 = vpop.f32.mrb[0].mxu0
    %v2239 = vadd.f32 %v2186, %v2238
    %v2240 = vpop.f32.mrb[0].mxu0
    %v2241 = vadd.f32 %v2188, %v2240
    %v2242 = vpop.f32.mrb[0].mxu0
    %v2243 = vadd.f32 %v2190, %v2242
    %v2244 = vpop.f32.mrb[0].mxu0
    %v2245 = vadd.f32 %v2192, %v2244
    %2246 = vmatprep.mubr.bf16.mxu0 %v202
    %2247 = vmatmul.mubr.bf16.gmra.mrb[0].mxu0 %v195
    %v2248 = vpop.f32.mrb[0].mxu0
    %v2249 = vadd.f32 %v2196, %v2248
    %v2250 = vpop.f32.mrb[0].mxu0
    %v2251 = vadd.f32 %v2198, %v2250
    %v2252 = vpop.f32.mrb[0].mxu0
    %v2253 = vadd.f32 %v2200, %v2252
    %v2254 = vpop.f32.mrb[0].mxu0
    %v2255 = vadd.f32 %v2202, %v2254
    %2256 = vdwg.mxu0
    %2257 = vmatprep.subr.bf16.mxu0 %v1474
    %2258 = vmatpush1.bf16.msra.mxu0 %v1473
    %2259 = vmatprep.subr.bf16.mxu0 %v1483
    %2260 = vmatpush1.bf16.msra.mxu0 %v1482
    %2261 = vmatprep.subr.bf16.mxu0 %v1492
    %2262 = vmatpush1.bf16.msra.mxu0 %v1491
    %2263 = vmatprep.subr.bf16.mxu0 %v1501
    %2264 = vmatpush1.bf16.msra.mxu0 %v1500
    %2265 = vmatprep.subr.bf16.mxu0 %v1510
    %2266 = vmatpush1.bf16.msra.mxu0 %v1509
    %2267 = vmatprep.subr.bf16.mxu0 %v1519
    %2268 = vmatpush1.bf16.msra.mxu0 %v1518
    %2269 = vmatprep.subr.bf16.mxu0 %v1528
    %2270 = vmatpush1.bf16.msra.mxu0 %v1527
    %2271 = vmatprep.subr.bf16.mxu0 %v1537
    %2272 = vmatpush1.bf16.msra.mxu0 %v1536
    %2273 = vmatprep.subr.bf16.mxu0 %v1546
    %2274 = vmatpush1.bf16.msra.mxu0 %v1545
    %2275 = vmatprep.subr.bf16.mxu0 %v1555
    %2276 = vmatpush1.bf16.msra.mxu0 %v1554
    %2277 = vmatprep.subr.bf16.mxu0 %v1564
    %2278 = vmatpush1.bf16.msra.mxu0 %v1563
    %2279 = vmatprep.subr.bf16.mxu0 %v1573
    %2280 = vmatpush1.bf16.msra.mxu0 %v1572
    %2281 = vmatprep.subr.bf16.mxu0 %v1582
    %2282 = vmatpush1.bf16.msra.mxu0 %v1581
    %2283 = vmatprep.subr.bf16.mxu0 %v1591
    %2284 = vmatpush1.bf16.msra.mxu0 %v1590
    %2285 = vmatprep.subr.bf16.mxu0 %v1600
    %2286 = vmatpush1.bf16.msra.mxu0 %v1599
    %2287 = vmatprep.subr.bf16.mxu0 %v1609
    %2288 = vmatpush1.bf16.msra.mxu0 %v1608
    %2289 = vmatprep.mubr.bf16.mxu0 %v183
    %2290 = vmatmul.mubr.bf16.gmra.mrb[0].mxu0 %v176
    %v2291 = vpop.f32.mrb[0].mxu0
    %v2292 = vadd.f32 %v547, %v2291
    %v2293 = vpop.f32.mrb[0].mxu0
    %v2294 = vadd.f32 %v551, %v2293
    %v2295 = vpop.f32.mrb[0].mxu0
    %v2296 = vadd.f32 %v547, %v2295
    %v2297 = vpop.f32.mrb[0].mxu0
    %v2298 = vadd.f32 %v551, %v2297
    %2299 = vmatprep.mubr.bf16.mxu0 %v187
    %2300 = vmatmul.mubr.bf16.gmra.mrb[0].mxu0 %v179
    %v2301 = vpop.f32.mrb[0].mxu0
    %v2302 = vadd.f32 %v547, %v2301
    %v2303 = vpop.f32.mrb[0].mxu0
    %v2304 = vadd.f32 %v551, %v2303
    %v2305 = vpop.f32.mrb[0].mxu0
    %v2306 = vadd.f32 %v547, %v2305
    %v2307 = vpop.f32.mrb[0].mxu0
    %v2308 = vadd.f32 %v551, %v2307
    %2309 = vdwg.mxu0
    %2310 = vmatprep.subr.bf16.mxu0 %v1618
    %2311 = vmatpush1.bf16.msra.mxu0 %v1617
    %2312 = vmatprep.subr.bf16.mxu0 %v1627
    %2313 = vmatpush1.bf16.msra.mxu0 %v1626
    %2314 = vmatprep.subr.bf16.mxu0 %v1636
    %2315 = vmatpush1.bf16.msra.mxu0 %v1635
    %2316 = vmatprep.subr.bf16.mxu0 %v1645
    %2317 = vmatpush1.bf16.msra.mxu0 %v1644
    %2318 = vmatprep.subr.bf16.mxu0 %v1654
    %2319 = vmatpush1.bf16.msra.mxu0 %v1653
    %2320 = vmatprep.subr.bf16.mxu0 %v1663
    %2321 = vmatpush1.bf16.msra.mxu0 %v1662
    %2322 = vmatprep.subr.bf16.mxu0 %v1672
    %2323 = vmatpush1.bf16.msra.mxu0 %v1671
    %2324 = vmatprep.subr.bf16.mxu0 %v1681
    %2325 = vmatpush1.bf16.msra.mxu0 %v1680
    %2326 = vmatprep.subr.bf16.mxu0 %v1690
    %2327 = vmatpush1.bf16.msra.mxu0 %v1689
    %2328 = vmatprep.subr.bf16.mxu0 %v1699
    %2329 = vmatpush1.bf16.msra.mxu0 %v1698
    %2330 = vmatprep.subr.bf16.mxu0 %v1708
    %2331 = vmatpush1.bf16.msra.mxu0 %v1707
    %2332 = vmatprep.subr.bf16.mxu0 %v1717
    %2333 = vmatpush1.bf16.msra.mxu0 %v1716
    %2334 = vmatprep.subr.bf16.mxu0 %v1726
    %2335 = vmatpush1.bf16.msra.mxu0 %v1725
    %2336 = vmatprep.subr.bf16.mxu0 %v1735
    %2337 = vmatpush1.bf16.msra.mxu0 %v1734
    %2338 = vmatprep.subr.bf16.mxu0 %v1744
    %2339 = vmatpush1.bf16.msra.mxu0 %v1743
    %2340 = vmatprep.subr.bf16.mxu0 %v1753
    %2341 = vmatpush1.bf16.msra.mxu0 %v1752
    %2342 = vmatprep.mubr.bf16.mxu0 %v199
    %2343 = vmatmul.mubr.bf16.gmra.mrb[0].mxu0 %v191
    %v2344 = vpop.f32.mrb[0].mxu0
    %v2345 = vadd.f32 %v2292, %v2344
    %v2346 = vpop.f32.mrb[0].mxu0
    %v2347 = vadd.f32 %v2294, %v2346
    %v2348 = vpop.f32.mrb[0].mxu0
    %v2349 = vadd.f32 %v2296, %v2348
    %v2350 = vpop.f32.mrb[0].mxu0
    %v2351 = vadd.f32 %v2298, %v2350
    %2352 = vmatprep.mubr.bf16.mxu0 %v202
    %2353 = vmatmul.mubr.bf16.gmra.mrb[0].mxu0 %v195
    %v2354 = vpop.f32.mrb[0].mxu0
    %v2355 = vadd.f32 %v2302, %v2354
    %v2356 = vpop.f32.mrb[0].mxu0
    %v2357 = vadd.f32 %v2304, %v2356
    %v2358 = vpop.f32.mrb[0].mxu0
    %v2359 = vadd.f32 %v2306, %v2358
    %v2360 = vpop.f32.mrb[0].mxu0
    %v2361 = vadd.f32 %v2308, %v2360
    %2362 = vdwg.mxu0
    %2363 = vmatprep.subr.bf16.mxu0 %v1476
    %2364 = vmatpush1.bf16.msra.mxu0 %v1475
    %2365 = vmatprep.subr.bf16.mxu0 %v1485
    %2366 = vmatpush1.bf16.msra.mxu0 %v1484
    %2367 = vmatprep.subr.bf16.mxu0 %v1494
    %2368 = vmatpush1.bf16.msra.mxu0 %v1493
    %2369 = vmatprep.subr.bf16.mxu0 %v1503
    %2370 = vmatpush1.bf16.msra.mxu0 %v1502
    %2371 = vmatprep.subr.bf16.mxu0 %v1512
    %2372 = vmatpush1.bf16.msra.mxu0 %v1511
    %2373 = vmatprep.subr.bf16.mxu0 %v1521
    %2374 = vmatpush1.bf16.msra.mxu0 %v1520
    %2375 = vmatprep.subr.bf16.mxu0 %v1530
    %2376 = vmatpush1.bf16.msra.mxu0 %v1529
    %2377 = vmatprep.subr.bf16.mxu0 %v1539
    %2378 = vmatpush1.bf16.msra.mxu0 %v1538
    %2379 = vmatprep.subr.bf16.mxu0 %v1548
    %2380 = vmatpush1.bf16.msra.mxu0 %v1547
    %2381 = vmatprep.subr.bf16.mxu0 %v1557
    %2382 = vmatpush1.bf16.msra.mxu0 %v1556
    %2383 = vmatprep.subr.bf16.mxu0 %v1566
    %2384 = vmatpush1.bf16.msra.mxu0 %v1565
    %2385 = vmatprep.subr.bf16.mxu0 %v1575
    %2386 = vmatpush1.bf16.msra.mxu0 %v1574
    %2387 = vmatprep.subr.bf16.mxu0 %v1584
    %2388 = vmatpush1.bf16.msra.mxu0 %v1583
    %2389 = vmatprep.subr.bf16.mxu0 %v1593
    %2390 = vmatpush1.bf16.msra.mxu0 %v1592
    %2391 = vmatprep.subr.bf16.mxu0 %v1602
    %2392 = vmatpush1.bf16.msra.mxu0 %v1601
    %2393 = vmatprep.subr.bf16.mxu0 %v1611
    %2394 = vmatpush1.bf16.msra.mxu0 %v1610
    %2395 = vmatprep.mubr.bf16.mxu0 %v183
    %2396 = vmatmul.mubr.bf16.gmra.mrb[0].mxu0 %v176
    %v2397 = vpop.f32.mrb[0].mxu0
    %v2398 = vadd.f32 %v555, %v2397
    %v2399 = vpop.f32.mrb[0].mxu0
    %v2400 = vadd.f32 %v559, %v2399
    %v2401 = vpop.f32.mrb[0].mxu0
    %v2402 = vadd.f32 %v555, %v2401
    %v2403 = vpop.f32.mrb[0].mxu0
    %v2404 = vadd.f32 %v559, %v2403
    %2405 = vmatprep.mubr.bf16.mxu0 %v187
    %2406 = vmatmul.mubr.bf16.gmra.mrb[0].mxu0 %v179
    %v2407 = vpop.f32.mrb[0].mxu0
    %v2408 = vadd.f32 %v555, %v2407
    %v2409 = vpop.f32.mrb[0].mxu0
    %v2410 = vadd.f32 %v559, %v2409
    %v2411 = vpop.f32.mrb[0].mxu0
    %v2412 = vadd.f32 %v555, %v2411
    %v2413 = vpop.f32.mrb[0].mxu0
    %v2414 = vadd.f32 %v559, %v2413
    %2415 = vdwg.mxu0
    %2416 = vmatprep.subr.bf16.mxu0 %v1620
    %2417 = vmatpush1.bf16.msra.mxu0 %v1619
    %2418 = vmatprep.subr.bf16.mxu0 %v1629
    %2419 = vmatpush1.bf16.msra.mxu0 %v1628
    %2420 = vmatprep.subr.bf16.mxu0 %v1638
    %2421 = vmatpush1.bf16.msra.mxu0 %v1637
    %2422 = vmatprep.subr.bf16.mxu0 %v1647
    %2423 = vmatpush1.bf16.msra.mxu0 %v1646
    %2424 = vmatprep.subr.bf16.mxu0 %v1656
    %2425 = vmatpush1.bf16.msra.mxu0 %v1655
    %2426 = vmatprep.subr.bf16.mxu0 %v1665
    %2427 = vmatpush1.bf16.msra.mxu0 %v1664
    %2428 = vmatprep.subr.bf16.mxu0 %v1674
    %2429 = vmatpush1.bf16.msra.mxu0 %v1673
    %2430 = vmatprep.subr.bf16.mxu0 %v1683
    %2431 = vmatpush1.bf16.msra.mxu0 %v1682
    %2432 = vmatprep.subr.bf16.mxu0 %v1692
    %2433 = vmatpush1.bf16.msra.mxu0 %v1691
    %2434 = vmatprep.subr.bf16.mxu0 %v1701
    %2435 = vmatpush1.bf16.msra.mxu0 %v1700
    %2436 = vmatprep.subr.bf16.mxu0 %v1710
    %2437 = vmatpush1.bf16.msra.mxu0 %v1709
    %2438 = vmatprep.subr.bf16.mxu0 %v1719
    %2439 = vmatpush1.bf16.msra.mxu0 %v1718
    %2440 = vmatprep.subr.bf16.mxu0 %v1728
    %2441 = vmatpush1.bf16.msra.mxu0 %v1727
    %2442 = vmatprep.subr.bf16.mxu0 %v1737
    %2443 = vmatpush1.bf16.msra.mxu0 %v1736
    %2444 = vmatprep.subr.bf16.mxu0 %v1746
    %2445 = vmatpush1.bf16.msra.mxu0 %v1745
    %2446 = vmatprep.subr.bf16.mxu0 %v1755
    %2447 = vmatpush1.bf16.msra.mxu0 %v1754
    %2448 = vmatprep.mubr.bf16.mxu0 %v199
    %2449 = vmatmul.mubr.bf16.gmra.mrb[0].mxu0 %v191
    %v2450 = vpop.f32.mrb[0].mxu0
    %v2451 = vadd.f32 %v2398, %v2450
    %v2452 = vpop.f32.mrb[0].mxu0
    %v2453 = vadd.f32 %v2400, %v2452
    %v2454 = vpop.f32.mrb[0].mxu0
    %v2455 = vadd.f32 %v2402, %v2454
    %v2456 = vpop.f32.mrb[0].mxu0
    %v2457 = vadd.f32 %v2404, %v2456
    %2458 = vmatprep.mubr.bf16.mxu0 %v202
    %2459 = vmatmul.mubr.bf16.gmra.mrb[0].mxu0 %v195
    %v2460 = vpop.f32.mrb[0].mxu0
    %v2461 = vadd.f32 %v2408, %v2460
    %v2462 = vpop.f32.mrb[0].mxu0
    %v2463 = vadd.f32 %v2410, %v2462
    %v2464 = vpop.f32.mrb[0].mxu0
    %v2465 = vadd.f32 %v2412, %v2464
    %v2466 = vpop.f32.mrb[0].mxu0
    %v2467 = vadd.f32 %v2414, %v2466
    %2468 = vdwg.mxu0
    %2469 = vmatprep.subr.bf16.mxu0 0
    %2470 = vmatpush1.bf16.msra.mxu0 %v1477
    %2471 = vmatprep.subr.bf16.mxu0 0
    %2472 = vmatpush1.bf16.msra.mxu0 %v1486
    %2473 = vmatprep.subr.bf16.mxu0 0
    %2474 = vmatpush1.bf16.msra.mxu0 %v1495
    %2475 = vmatprep.subr.bf16.mxu0 0
    %2476 = vmatpush1.bf16.msra.mxu0 %v1504
    %2477 = vmatprep.subr.bf16.mxu0 0
    %2478 = vmatpush1.bf16.msra.mxu0 %v1513
    %2479 = vmatprep.subr.bf16.mxu0 0
    %2480 = vmatpush1.bf16.msra.mxu0 %v1522
    %2481 = vmatprep.subr.bf16.mxu0 0
    %2482 = vmatpush1.bf16.msra.mxu0 %v1531
    %2483 = vmatprep.subr.bf16.mxu0 0
    %2484 = vmatpush1.bf16.msra.mxu0 %v1540
    %2485 = vmatprep.subr.bf16.mxu0 0
    %2486 = vmatpush1.bf16.msra.mxu0 %v1549
    %2487 = vmatprep.subr.bf16.mxu0 0
    %2488 = vmatpush1.bf16.msra.mxu0 %v1558
    %2489 = vmatprep.subr.bf16.mxu0 0
    %2490 = vmatpush1.bf16.msra.mxu0 %v1567
    %2491 = vmatprep.subr.bf16.mxu0 0
    %2492 = vmatpush1.bf16.msra.mxu0 %v1576
    %2493 = vmatprep.subr.bf16.mxu0 0
    %2494 = vmatpush1.bf16.msra.mxu0 %v1585
    %2495 = vmatprep.subr.bf16.mxu0 0
    %2496 = vmatpush1.bf16.msra.mxu0 %v1594
    %2497 = vmatprep.subr.bf16.mxu0 0
    %2498 = vmatpush1.bf16.msra.mxu0 %v1603
    %2499 = vmatprep.subr.bf16.mxu0 0
    %2500 = vmatpush1.bf16.msra.mxu0 %v1612
    %2501 = vmatprep.mubr.bf16.mxu0 %v183
    %2502 = vmatmul.mubr.bf16.gmra.mrb[0].mxu0 %v176
    %v2503 = vpop.f32.mrb[0].mxu0
    %v2504 = vadd.f32 %v563, %v2503
    %v2505 = vpop.f32.mrb[0].mxu0
    %v2506 = vpop.f32.mrb[0].mxu0
    %v2507 = vadd.f32 %v563, %v2506
    %v2508 = vpop.f32.mrb[0].mxu0
    %2509 = vmatprep.mubr.bf16.mxu0 %v187
    %2510 = vmatmul.mubr.bf16.gmra.mrb[0].mxu0 %v179
    %v2511 = vpop.f32.mrb[0].mxu0
    %v2512 = vadd.f32 %v563, %v2511
    %v2513 = vpop.f32.mrb[0].mxu0
    %v2514 = vpop.f32.mrb[0].mxu0
    %v2515 = vadd.f32 %v563, %v2514
    %v2516 = vpop.f32.mrb[0].mxu0
    %2517 = vdwg.mxu0
    %2518 = vmatprep.subr.bf16.mxu0 0
    %2519 = vmatpush1.bf16.msra.mxu0 %v1621
    %2520 = vmatprep.subr.bf16.mxu0 0
    %2521 = vmatpush1.bf16.msra.mxu0 %v1630
    %2522 = vmatprep.subr.bf16.mxu0 0
    %2523 = vmatpush1.bf16.msra.mxu0 %v1639
    %2524 = vmatprep.subr.bf16.mxu0 0
    %2525 = vmatpush1.bf16.msra.mxu0 %v1648
    %2526 = vmatprep.subr.bf16.mxu0 0
    %2527 = vmatpush1.bf16.msra.mxu0 %v1657
    %2528 = vmatprep.subr.bf16.mxu0 0
    %2529 = vmatpush1.bf16.msra.mxu0 %v1666
    %2530 = vmatprep.subr.bf16.mxu0 0
    %2531 = vmatpush1.bf16.msra.mxu0 %v1675
    %2532 = vmatprep.subr.bf16.mxu0 0
    %2533 = vmatpush1.bf16.msra.mxu0 %v1684
    %2534 = vmatprep.subr.bf16.mxu0 0
    %2535 = vmatpush1.bf16.msra.mxu0 %v1693
    %2536 = vmatprep.subr.bf16.mxu0 0
    %2537 = vmatpush1.bf16.msra.mxu0 %v1702
    %2538 = vmatprep.subr.bf16.mxu0 0
    %2539 = vmatpush1.bf16.msra.mxu0 %v1711
    %2540 = vmatprep.subr.bf16.mxu0 0
    %2541 = vmatpush1.bf16.msra.mxu0 %v1720
    %2542 = vmatprep.subr.bf16.mxu0 0
    %2543 = vmatpush1.bf16.msra.mxu0 %v1729
    %2544 = vmatprep.subr.bf16.mxu0 0
    %2545 = vmatpush1.bf16.msra.mxu0 %v1738
    %2546 = vmatprep.subr.bf16.mxu0 0
    %2547 = vmatpush1.bf16.msra.mxu0 %v1747
    %2548 = vmatprep.subr.bf16.mxu0 0
    %2549 = vmatpush1.bf16.msra.mxu0 %v1756
    %2550 = vmatprep.mubr.bf16.mxu0 %v199
    %2551 = vmatmul.mubr.bf16.gmra.mrb[0].mxu0 %v191
    %v2552 = vpop.f32.mrb[0].mxu0
    %v2553 = vadd.f32 %v2504, %v2552
    %v2554 = vpop.f32.mrb[0].mxu0
    %v2555 = vpop.f32.mrb[0].mxu0
    %v2556 = vadd.f32 %v2507, %v2555
    %v2557 = vpop.f32.mrb[0].mxu0
    %2558 = vmatprep.mubr.bf16.mxu0 %v202
    %2559 = vmatmul.mubr.bf16.gmra.mrb[0].mxu0 %v195
    %v2560 = vpop.f32.mrb[0].mxu0
    %v2561 = vadd.f32 %v2512, %v2560
    %v2562 = vpop.f32.mrb[0].mxu0
    %v2563 = vpop.f32.mrb[0].mxu0
    %v2564 = vadd.f32 %v2515, %v2563
    %v2565 = vpop.f32.mrb[0].mxu0
    %2566 = vdwg.mxu0
    %v2567 = vmax.f32 %v2133, 0.0
    %v2568 = vmax.f32 %v2135, 0.0
    %v2569 = vmax.f32 %v2239, 0.0
    %v2570 = vmax.f32 %v2241, 0.0
    %v2571 = vmax.f32 %v2345, 0.0
    %v2572 = vmax.f32 %v2347, 0.0
    %v2573 = vmax.f32 %v2451, 0.0
    %v2574 = vmax.f32 %v2453, 0.0
    %v2575 = vmax.f32 %v2553, 0.0
    %v2576 = vmax.f32 %v2137, 0.0
    %v2577 = vmax.f32 %v2139, 0.0
    %v2578 = vmax.f32 %v2243, 0.0
    %v2579 = vmax.f32 %v2245, 0.0
    %v2580 = vmax.f32 %v2349, 0.0
    %v2581 = vmax.f32 %v2351, 0.0
    %v2582 = vmax.f32 %v2455, 0.0
    %v2583 = vmax.f32 %v2457, 0.0
    %v2584 = vmax.f32 %v2556, 0.0
    %v2585 = vmax.f32 %v2143, 0.0
    %v2586 = vmax.f32 %v2145, 0.0
    %v2587 = vmax.f32 %v2249, 0.0
    %v2588 = vmax.f32 %v2251, 0.0
    %v2589 = vmax.f32 %v2355, 0.0
    %v2590 = vmax.f32 %v2357, 0.0
    %v2591 = vmax.f32 %v2461, 0.0
    %v2592 = vmax.f32 %v2463, 0.0
    %v2593 = vmax.f32 %v2561, 0.0
    %v2594 = vmax.f32 %v2147, 0.0
    %v2595 = vmax.f32 %v2149, 0.0
    %v2596 = vmax.f32 %v2253, 0.0
    %v2597 = vmax.f32 %v2255, 0.0
    %v2598 = vmax.f32 %v2359, 0.0
    %v2599 = vmax.f32 %v2361, 0.0
    %v2600 = vmax.f32 %v2465, 0.0
    %v2601 = vmax.f32 %v2467, 0.0
    %v2602 = vmax.f32 %v2564, 0.0
    %vm2603 = vcmask 1045504
    %v2604 = vsel %vm2603, %v2576, -inf
    %v2605 = vmax.f32 %v2567, %v2604
    %v2606 = vrot.slane %v2605, 4
    %v2607 = vmax.f32 %v2605, %v2606
    %v2608 = vrot.slane %v2607, 2
    %v2609 = vmax.f32 %v2607, %v2608
    %v2610 = vrot.slane %v2609, 1
    %v2611 = vmax.f32 %v2609, %v2610
    %v2612 = vsel %vm2603, %v2577, -inf
    %v2613 = vmax.f32 %v2568, %v2612
    %v2614 = vrot.slane %v2613, 4
    %v2615 = vmax.f32 %v2613, %v2614
    %v2616 = vrot.slane %v2615, 2
    %v2617 = vmax.f32 %v2615, %v2616
    %v2618 = vrot.slane %v2617, 1
    %v2619 = vmax.f32 %v2617, %v2618
    %v2620 = vsel %vm2603, %v2578, -inf
    %v2621 = vmax.f32 %v2569, %v2620
    %v2622 = vrot.slane %v2621, 4
    %v2623 = vmax.f32 %v2621, %v2622
    %v2624 = vrot.slane %v2623, 2
    %v2625 = vmax.f32 %v2623, %v2624
    %v2626 = vrot.slane %v2625, 1
    %v2627 = vmax.f32 %v2625, %v2626
    %v2628 = vsel %vm2603, %v2594, -inf
    %v2629 = vmax.f32 %v2585, %v2628
    %v2630 = vrot.slane %v2629, 4
    %v2631 = vmax.f32 %v2629, %v2630
    %v2632 = vrot.slane %v2631, 2
    %v2633 = vmax.f32 %v2631, %v2632
    %v2634 = vrot.slane %v2633, 1
    %v2635 = vmax.f32 %v2633, %v2634
    %v2636 = vsel %vm2603, %v2595, -inf
    %v2637 = vmax.f32 %v2586, %v2636
    %v2638 = vrot.slane %v2637, 4
    %v2639 = vmax.f32 %v2637, %v2638
    %v2640 = vrot.slane %v2639, 2
    %v2641 = vmax.f32 %v2639, %v2640
    %v2642 = vrot.slane %v2641, 1
    %v2643 = vmax.f32 %v2641, %v2642
    %v2644 = vsel %vm2603, %v2596, -inf
    %v2645 = vmax.f32 %v2587, %v2644
    %v2646 = vrot.slane %v2645, 4
    %v2647 = vmax.f32 %v2645, %v2646
    %v2648 = vrot.slane %v2647, 2
    %v2649 = vmax.f32 %v2647, %v2648
    %v2650 = vrot.slane %v2649, 1
    %v2651 = vmax.f32 %v2649, %v2650
    %vm2652 = vcmask 1043456
    %v2653 = vsel %vm2652, %v2579, -inf
    %v2654 = vmax.f32 %v2570, %v2653
    %v2655 = vrot.slane %v2654, 4
    %v2656 = vmax.f32 %v2654, %v2655
    %v2657 = vrot.slane %v2656, 2
    %v2658 = vmax.f32 %v2656, %v2657
    %v2659 = vrot.slane %v2658, 1
    %v2660 = vmax.f32 %v2658, %v2659
    %v2661 = vsel %vm2652, %v2580, -inf
    %v2662 = vmax.f32 %v2571, %v2661
    %v2663 = vrot.slane %v2662, 4
    %v2664 = vmax.f32 %v2662, %v2663
    %v2665 = vrot.slane %v2664, 2
    %v2666 = vmax.f32 %v2664, %v2665
    %v2667 = vrot.slane %v2666, 1
    %v2668 = vmax.f32 %v2666, %v2667
    %v2669 = vsel %vm2652, %v2581, -inf
    %v2670 = vmax.f32 %v2572, %v2669
    %v2671 = vrot.slane %v2670, 4
    %v2672 = vmax.f32 %v2670, %v2671
    %v2673 = vrot.slane %v2672, 2
    %v2674 = vmax.f32 %v2672, %v2673
    %v2675 = vrot.slane %v2674, 1
    %v2676 = vmax.f32 %v2674, %v2675
    %v2677 = vsel %vm2652, %v2597, -inf
    %v2678 = vmax.f32 %v2588, %v2677
    %v2679 = vrot.slane %v2678, 4
    %v2680 = vmax.f32 %v2678, %v2679
    %v2681 = vrot.slane %v2680, 2
    %v2682 = vmax.f32 %v2680, %v2681
    %v2683 = vrot.slane %v2682, 1
    %v2684 = vmax.f32 %v2682, %v2683
    %v2685 = vsel %vm2652, %v2598, -inf
    %v2686 = vmax.f32 %v2589, %v2685
    %v2687 = vrot.slane %v2686, 4
    %v2688 = vmax.f32 %v2686, %v2687
    %v2689 = vrot.slane %v2688, 2
    %v2690 = vmax.f32 %v2688, %v2689
    %v2691 = vrot.slane %v2690, 1
    %v2692 = vmax.f32 %v2690, %v2691
    %v2693 = vsel %vm2652, %v2599, -inf
    %v2694 = vmax.f32 %v2590, %v2693
    %v2695 = vrot.slane %v2694, 4
    %v2696 = vmax.f32 %v2694, %v2695
    %v2697 = vrot.slane %v2696, 2
    %v2698 = vmax.f32 %v2696, %v2697
    %v2699 = vrot.slane %v2698, 1
    %v2700 = vmax.f32 %v2698, %v2699
    %vm2701 = vcmask 1041408
    %v2702 = vsel %vm2701, %v2582, -inf
    %v2703 = vmax.f32 %v2573, %v2702
    %v2704 = vrot.slane %v2703, 4
    %v2705 = vmax.f32 %v2703, %v2704
    %v2706 = vrot.slane %v2705, 2
    %v2707 = vmax.f32 %v2705, %v2706
    %v2708 = vrot.slane %v2707, 1
    %v2709 = vmax.f32 %v2707, %v2708
    %v2710 = vsel %vm2701, %v2583, -inf
    %v2711 = vmax.f32 %v2574, %v2710
    %v2712 = vrot.slane %v2711, 4
    %v2713 = vmax.f32 %v2711, %v2712
    %v2714 = vrot.slane %v2713, 2
    %v2715 = vmax.f32 %v2713, %v2714
    %v2716 = vrot.slane %v2715, 1
    %v2717 = vmax.f32 %v2715, %v2716
    %v2718 = vsel %vm2701, %v2584, -inf
    %v2719 = vmax.f32 %v2575, %v2718
    %v2720 = vrot.slane %v2719, 4
    %v2721 = vmax.f32 %v2719, %v2720
    %v2722 = vrot.slane %v2721, 2
    %v2723 = vmax.f32 %v2721, %v2722
    %v2724 = vrot.slane %v2723, 1
    %v2725 = vmax.f32 %v2723, %v2724
    %v2726 = vsel %vm2701, %v2600, -inf
    %v2727 = vmax.f32 %v2591, %v2726
    %v2728 = vrot.slane %v2727, 4
    %v2729 = vmax.f32 %v2727, %v2728
    %v2730 = vrot.slane %v2729, 2
    %v2731 = vmax.f32 %v2729, %v2730
    %v2732 = vrot.slane %v2731, 1
    %v2733 = vmax.f32 %v2731, %v2732
    %v2734 = vsel %vm2701, %v2601, -inf
    %v2735 = vmax.f32 %v2592, %v2734
    %v2736 = vrot.slane %v2735, 4
    %v2737 = vmax.f32 %v2735, %v2736
    %v2738 = vrot.slane %v2737, 2
    %v2739 = vmax.f32 %v2737, %v2738
    %v2740 = vrot.slane %v2739, 1
    %v2741 = vmax.f32 %v2739, %v2740
    %v2742 = vsel %vm2701, %v2602, -inf
    %v2743 = vmax.f32 %v2593, %v2742
    %v2744 = vrot.slane %v2743, 4
    %v2745 = vmax.f32 %v2743, %v2744
    %v2746 = vrot.slane %v2745, 2
    %v2747 = vmax.f32 %v2745, %v2746
    %v2748 = vrot.slane %v2747, 1
    %v2749 = vmax.f32 %v2747, %v2748
    %vm2756 = vcmask 1041409
    %v2757 = vsel %vm2756, %v2635, %v2611
    %v2758 = vsel %vm2756, %v2643, %v2619
    %v2759 = vsel %vm2756, %v2651, %v2627
    %v2769 = vsel %vm2756, %v2684, %v2660
    %v2770 = vsel %vm2756, %v2692, %v2668
    %v2771 = vsel %vm2756, %v2700, %v2676
    %v2781 = vsel %vm2756, %v2733, %v2709
    %v2782 = vsel %vm2756, %v2741, %v2717
    %v2783 = vsel %vm2756, %v2749, %v2725
    %v2787 = vpack.c.bf16 %v2757, %v2757
    %v2788 = vpack.c.bf16 %v2758, %v2758
    %v2789 = vpack.c.bf16 %v2759, %v2759
    %v2790 = vpack.c.bf16 %v2769, %v2769
    %v2791 = vpack.c.bf16 %v2770, %v2770
    %v2792 = vpack.c.bf16 %v2771, %v2771
    %v2793 = vpack.c.bf16 %v2781, %v2781
    %v2794 = vpack.c.bf16 %v2782, %v2782
    %v2795 = vpack.c.bf16 %v2783, %v2783
    %v2796 = vld [vmem:[#allocation5] sm:$0xf]
    %v2797 = vld [vmem:[#allocation5 + $0x4] sm:$0xf]
    %v2798 = vld [vmem:[#allocation5 + $0x8] sm:$0xf]
    %v2799 = vld [vmem:[#allocation5 + $0xc] sm:$0xf]
    %v2800 = vld [vmem:[#allocation5 + $0x10] sm:$0xf]
    %v2801 = vld [vmem:[#allocation5 + $0x14] sm:$0xf]
    %v2802 = vld [vmem:[#allocation5 + $0x18] sm:$0xf]
    %v2803 = vld [vmem:[#allocation5 + $0x1c] sm:$0xf]
    %v2804 = vld [vmem:[#allocation5 + $0x20] sm:$0xf]
    %v2805 = vld [vmem:[#allocation5 + $0x24] sm:$0xf]
    %v2806 = vld [vmem:[#allocation5 + $0x28] sm:$0xf]
    %v2807 = vld [vmem:[#allocation5 + $0x2c] sm:$0xf]
    %v2808 = vld [vmem:[#allocation5 + $0x30] sm:$0xf]
    %v2809 = vld [vmem:[#allocation5 + $0x34] sm:$0xf]
    %v2810 = vld [vmem:[#allocation5 + $0x38] sm:$0xf]
    %v2811 = vld [vmem:[#allocation5 + $0x3c] sm:$0xf]
    %v2812 = vld [vmem:[#allocation5 + $0x40] sm:$0xf]
    %v2813 = vld [vmem:[#allocation5 + $0x44] sm:$0xf]
    %v2814 = vld [vmem:[#allocation5 + $0x48] sm:$0xf]
    %v2815 = vld [vmem:[#allocation5 + $0x4c] sm:$0xf]
    %v2816 = vld [vmem:[#allocation5 + $0x50] sm:$0xf]
    %v2817 = vld [vmem:[#allocation5 + $0x54] sm:$0xf]
    %v2818 = vld [vmem:[#allocation5 + $0x58] sm:$0xf]
    %v2819 = vld [vmem:[#allocation5 + $0x5c] sm:$0xf]
    %v2820 = vld [vmem:[#allocation5 + $0x60] sm:$0xf]
    %v2821 = vld [vmem:[#allocation5 + $0x64] sm:$0xf]
    %v2822 = vld [vmem:[#allocation5 + $0x68] sm:$0xf]
    %v2823 = vld [vmem:[#allocation5 + $0x6c] sm:$0xf]
    %v2824 = vld [vmem:[#allocation5 + $0x70] sm:$0xf]
    %v2825 = vld [vmem:[#allocation5 + $0x74] sm:$0xf]
    %v2826 = vld [vmem:[#allocation5 + $0x78] sm:$0xf]
    %v2827 = vld [vmem:[#allocation5 + $0x7c] sm:$0xf]
    %v2828 = vld [vmem:[#allocation5 + $0x80] sm:$0xf]
    %v2829 = vld [vmem:[#allocation5 + $0x84] sm:$0xf]
    %v2830 = vld [vmem:[#allocation5 + $0x88] sm:$0xf]
    %v2831 = vld [vmem:[#allocation5 + $0x8c] sm:$0xf]
    %v2832 = vld [vmem:[#allocation5 + $0x90] sm:$0xf]
    %v2833 = vld [vmem:[#allocation5 + $0x94] sm:$0xf]
    %v2834 = vld [vmem:[#allocation5 + $0x98] sm:$0xf]
    %v2835 = vld [vmem:[#allocation5 + $0x9c] sm:$0xf]
    %v2836 = vld [vmem:[#allocation5 + $0xa0] sm:$0xf]
    %v2837 = vld [vmem:[#allocation5 + $0xa4] sm:$0xf]
    %v2838 = vld [vmem:[#allocation5 + $0xa8] sm:$0xf]
    %v2839 = vld [vmem:[#allocation5 + $0xac] sm:$0xf]
    %v2840 = vld [vmem:[#allocation5 + $0xb0] sm:$0xf]
    %v2841 = vld [vmem:[#allocation5 + $0xb4] sm:$0xf]
    %v2842 = vld [vmem:[#allocation5 + $0xb8] sm:$0xf]
    %v2843 = vld [vmem:[#allocation5 + $0xbc] sm:$0xf]
    %v2844 = vld [vmem:[#allocation5 + $0xc0] sm:$0xf]
    %v2845 = vld [vmem:[#allocation5 + $0xc4] sm:$0xf]
    %v2846 = vld [vmem:[#allocation5 + $0xc8] sm:$0xf]
    %v2847 = vld [vmem:[#allocation5 + $0xcc] sm:$0xf]
    %v2848 = vld [vmem:[#allocation5 + $0xd0] sm:$0xf]
    %v2849 = vld [vmem:[#allocation5 + $0xd4] sm:$0xf]
    %v2850 = vld [vmem:[#allocation5 + $0xd8] sm:$0xf]
    %v2851 = vld [vmem:[#allocation5 + $0xdc] sm:$0xf]
    %v2852 = vld [vmem:[#allocation5 + $0xe0] sm:$0xf]
    %v2853 = vld [vmem:[#allocation5 + $0xe4] sm:$0xf]
    %v2854 = vld [vmem:[#allocation5 + $0xe8] sm:$0xf]
    %v2855 = vld [vmem:[#allocation5 + $0xec] sm:$0xf]
    %v2856 = vld [vmem:[#allocation5 + $0xf0] sm:$0xf]
    %v2857 = vld [vmem:[#allocation5 + $0xf4] sm:$0xf]
    %v2858 = vld [vmem:[#allocation5 + $0xf8] sm:$0xf]
    %v2859 = vld [vmem:[#allocation5 + $0xfc] sm:$0xf]
    %v2860 = vld [vmem:[#allocation5 + $0x100] sm:$0xf]
    %v2861 = vld [vmem:[#allocation5 + $0x104] sm:$0xf]
    %v2862 = vld [vmem:[#allocation5 + $0x108] sm:$0xf]
    %v2863 = vld [vmem:[#allocation5 + $0x10c] sm:$0xf]
    %v2864 = vld [vmem:[#allocation5 + $0x110] sm:$0xf]
    %v2865 = vld [vmem:[#allocation5 + $0x114] sm:$0xf]
    %v2866 = vld [vmem:[#allocation5 + $0x118] sm:$0xf]
    %v2867 = vld [vmem:[#allocation5 + $0x11c] sm:$0xf]
    %v2868 = vld [vmem:[#allocation5 + $0x120] sm:$0xf]
    %v2869 = vld [vmem:[#allocation5 + $0x124] sm:$0xf]
    %v2870 = vld [vmem:[#allocation5 + $0x128] sm:$0xf]
    %v2871 = vld [vmem:[#allocation5 + $0x12c] sm:$0xf]
    %v2872 = vld [vmem:[#allocation5 + $0x130] sm:$0xf]
    %v2873 = vld [vmem:[#allocation5 + $0x134] sm:$0xf]
    %v2874 = vld [vmem:[#allocation5 + $0x138] sm:$0xf]
    %v2875 = vld [vmem:[#allocation5 + $0x13c] sm:$0xf]
    %v2876 = vld [vmem:[#allocation5 + $0x140] sm:$0xf]
    %v2877 = vld [vmem:[#allocation5 + $0x144] sm:$0xf]
    %v2878 = vld [vmem:[#allocation5 + $0x148] sm:$0xf]
    %v2879 = vld [vmem:[#allocation5 + $0x14c] sm:$0xf]
    %v2880 = vld [vmem:[#allocation5 + $0x150] sm:$0xf]
    %v2881 = vld [vmem:[#allocation5 + $0x154] sm:$0xf]
    %v2882 = vld [vmem:[#allocation5 + $0x158] sm:$0xf]
    %v2883 = vld [vmem:[#allocation5 + $0x15c] sm:$0xf]
    %v2884 = vld [vmem:[#allocation5 + $0x160] sm:$0xf]
    %v2885 = vld [vmem:[#allocation5 + $0x164] sm:$0xf]
    %v2886 = vld [vmem:[#allocation5 + $0x168] sm:$0xf]
    %v2887 = vld [vmem:[#allocation5 + $0x16c] sm:$0xf]
    %v2888 = vld [vmem:[#allocation5 + $0x170] sm:$0xf]
    %v2889 = vld [vmem:[#allocation5 + $0x174] sm:$0xf]
    %v2890 = vld [vmem:[#allocation5 + $0x178] sm:$0xf]
    %v2891 = vld [vmem:[#allocation5 + $0x17c] sm:$0xf]
    %v2892 = vld [vmem:[#allocation5 + $0x180] sm:$0xf]
    %v2893 = vld [vmem:[#allocation5 + $0x184] sm:$0xf]
    %v2894 = vld [vmem:[#allocation5 + $0x188] sm:$0xf]
    %v2895 = vld [vmem:[#allocation5 + $0x18c] sm:$0xf]
    %v2896 = vld [vmem:[#allocation5 + $0x190] sm:$0xf]
    %v2897 = vld [vmem:[#allocation5 + $0x194] sm:$0xf]
    %v2898 = vld [vmem:[#allocation5 + $0x198] sm:$0xf]
    %v2899 = vld [vmem:[#allocation5 + $0x19c] sm:$0xf]
    %v2900 = vld [vmem:[#allocation5 + $0x1a0] sm:$0xf]
    %v2901 = vld [vmem:[#allocation5 + $0x1a4] sm:$0xf]
    %v2902 = vld [vmem:[#allocation5 + $0x1a8] sm:$0xf]
    %v2903 = vld [vmem:[#allocation5 + $0x1ac] sm:$0xf]
    %v2904 = vld [vmem:[#allocation5 + $0x1b0] sm:$0xf]
    %v2905 = vld [vmem:[#allocation5 + $0x1b4] sm:$0xf]
    %v2906 = vld [vmem:[#allocation5 + $0x1b8] sm:$0xf]
    %v2907 = vld [vmem:[#allocation5 + $0x1bc] sm:$0xf]
    %v2908 = vld [vmem:[#allocation5 + $0x1c0] sm:$0xf]
    %v2909 = vld [vmem:[#allocation5 + $0x1c4] sm:$0xf]
    %v2910 = vld [vmem:[#allocation5 + $0x1c8] sm:$0xf]
    %v2911 = vld [vmem:[#allocation5 + $0x1cc] sm:$0xf]
    %v2912 = vld [vmem:[#allocation5 + $0x1d0] sm:$0xf]
    %v2913 = vld [vmem:[#allocation5 + $0x1d4] sm:$0xf]
    %v2914 = vld [vmem:[#allocation5 + $0x1d8] sm:$0xf]
    %v2915 = vld [vmem:[#allocation5 + $0x1dc] sm:$0xf]
    %v2916 = vld [vmem:[#allocation5 + $0x1e0] sm:$0xf]
    %v2917 = vld [vmem:[#allocation5 + $0x1e4] sm:$0xf]
    %v2918 = vld [vmem:[#allocation5 + $0x1e8] sm:$0xf]
    %v2919 = vld [vmem:[#allocation5 + $0x1ec] sm:$0xf]
    %v2920 = vld [vmem:[#allocation5 + $0x1f0] sm:$0xf]
    %v2921 = vld [vmem:[#allocation5 + $0x1f4] sm:$0xf]
    %v2922 = vld [vmem:[#allocation5 + $0x1f8] sm:$0xf]
    %v2923 = vld [vmem:[#allocation5 + $0x1fc] sm:$0xf]
    %v2924 = vld [vmem:[#allocation5 + $0x200] sm:$0xf]
    %v2925 = vld [vmem:[#allocation5 + $0x204] sm:$0xf]
    %v2926 = vld [vmem:[#allocation5 + $0x208] sm:$0xf]
    %v2927 = vld [vmem:[#allocation5 + $0x20c] sm:$0xf]
    %v2928 = vld [vmem:[#allocation5 + $0x210] sm:$0xf]
    %v2929 = vld [vmem:[#allocation5 + $0x214] sm:$0xf]
    %v2930 = vld [vmem:[#allocation5 + $0x218] sm:$0xf]
    %v2931 = vld [vmem:[#allocation5 + $0x21c] sm:$0xf]
    %v2932 = vld [vmem:[#allocation5 + $0x220] sm:$0xf]
    %v2933 = vld [vmem:[#allocation5 + $0x224] sm:$0xf]
    %v2934 = vld [vmem:[#allocation5 + $0x228] sm:$0xf]
    %v2935 = vld [vmem:[#allocation5 + $0x22c] sm:$0xf]
    %v2936 = vld [vmem:[#allocation5 + $0x230] sm:$0xf]
    %v2937 = vld [vmem:[#allocation5 + $0x234] sm:$0xf]
    %v2938 = vld [vmem:[#allocation5 + $0x238] sm:$0xf]
    %v2939 = vld [vmem:[#allocation5 + $0x23c] sm:$0xf]
    %v2940 = vld [vmem:[#allocation7 + $0x9] sm:$0x1]
    %v2942 = vlaneseq
    %v2943 = vshrl.u32 %v2942, 7
    %v2944 = vsub.s32 0, %v2943
    %v2945 = vrot.slane %v2940, %v2944
    %v3091 = vunpack.c.l.b16 %v2796
    %v3092 = vunpack.c.l.b16 %v2797
    %v3093 = vunpack.c.l.b16 %v2798
    %v3094 = vunpack.c.l.b16 %v2799
    %v3095 = vunpack.c.l.b16 %v2800
    %v3096 = vunpack.c.l.b16 %v2801
    %v3097 = vunpack.c.l.b16 %v2802
    %v3098 = vunpack.c.l.b16 %v2803
    %v3099 = vunpack.c.l.b16 %v2804
    %v3100 = vunpack.c.l.b16 %v2805
    %v3101 = vunpack.c.l.b16 %v2806
    %v3102 = vunpack.c.l.b16 %v2807
    %v3103 = vunpack.c.l.b16 %v2808
    %v3104 = vunpack.c.l.b16 %v2809
    %v3105 = vunpack.c.l.b16 %v2810
    %v3106 = vunpack.c.l.b16 %v2811
    %v3107 = vunpack.c.l.b16 %v2812
    %v3108 = vunpack.c.l.b16 %v2813
    %v3109 = vunpack.c.l.b16 %v2814
    %v3110 = vunpack.c.l.b16 %v2815
    %v3111 = vunpack.c.l.b16 %v2816
    %v3112 = vunpack.c.l.b16 %v2817
    %v3113 = vunpack.c.l.b16 %v2818
    %v3114 = vunpack.c.l.b16 %v2819
    %v3115 = vunpack.c.l.b16 %v2820
    %v3116 = vunpack.c.l.b16 %v2821
    %v3117 = vunpack.c.l.b16 %v2822
    %v3118 = vunpack.c.l.b16 %v2823
    %v3119 = vunpack.c.l.b16 %v2824
    %v3120 = vunpack.c.l.b16 %v2825
    %v3121 = vunpack.c.l.b16 %v2826
    %v3122 = vunpack.c.l.b16 %v2827
    %v3123 = vunpack.c.l.b16 %v2828
    %v3124 = vunpack.c.l.b16 %v2829
    %v3125 = vunpack.c.l.b16 %v2830
    %v3126 = vunpack.c.l.b16 %v2831
    %v3127 = vunpack.c.l.b16 %v2832
    %v3128 = vunpack.c.l.b16 %v2833
    %v3129 = vunpack.c.l.b16 %v2834
    %v3130 = vunpack.c.l.b16 %v2835
    %v3131 = vunpack.c.l.b16 %v2836
    %v3132 = vunpack.c.l.b16 %v2837
    %v3133 = vunpack.c.l.b16 %v2838
    %v3134 = vunpack.c.l.b16 %v2839
    %v3135 = vunpack.c.l.b16 %v2840
    %v3136 = vunpack.c.l.b16 %v2841
    %v3137 = vunpack.c.l.b16 %v2842
    %v3138 = vunpack.c.l.b16 %v2843
    %v3139 = vunpack.c.l.b16 %v2844
    %v3140 = vunpack.c.l.b16 %v2845
    %v3141 = vunpack.c.l.b16 %v2846
    %v3142 = vunpack.c.l.b16 %v2847
    %v3143 = vunpack.c.l.b16 %v2848
    %v3144 = vunpack.c.l.b16 %v2849
    %v3145 = vunpack.c.l.b16 %v2850
    %v3146 = vunpack.c.l.b16 %v2851
    %v3147 = vunpack.c.l.b16 %v2852
    %v3148 = vunpack.c.l.b16 %v2853
    %v3149 = vunpack.c.l.b16 %v2854
    %v3150 = vunpack.c.l.b16 %v2855
    %v3151 = vunpack.c.l.b16 %v2856
    %v3152 = vunpack.c.l.b16 %v2857
    %v3153 = vunpack.c.l.b16 %v2858
    %v3154 = vunpack.c.l.b16 %v2859
    %v3155 = vunpack.c.l.b16 %v2860
    %v3156 = vunpack.c.l.b16 %v2861
    %v3157 = vunpack.c.l.b16 %v2862
    %v3158 = vunpack.c.l.b16 %v2863
    %v3159 = vunpack.c.l.b16 %v2864
    %v3160 = vunpack.c.l.b16 %v2865
    %v3161 = vunpack.c.l.b16 %v2866
    %v3162 = vunpack.c.l.b16 %v2867
    %v3163 = vunpack.c.l.b16 %v2868
    %v3164 = vunpack.c.l.b16 %v2869
    %v3165 = vunpack.c.l.b16 %v2870
    %v3166 = vunpack.c.l.b16 %v2871
    %v3167 = vunpack.c.l.b16 %v2872
    %v3168 = vunpack.c.l.b16 %v2873
    %v3169 = vunpack.c.l.b16 %v2874
    %v3170 = vunpack.c.l.b16 %v2875
    %v3171 = vunpack.c.l.b16 %v2876
    %v3172 = vunpack.c.l.b16 %v2877
    %v3173 = vunpack.c.l.b16 %v2878
    %v3174 = vunpack.c.l.b16 %v2879
    %v3175 = vunpack.c.l.b16 %v2880
    %v3176 = vunpack.c.l.b16 %v2881
    %v3177 = vunpack.c.l.b16 %v2882
    %v3178 = vunpack.c.l.b16 %v2883
    %v3179 = vunpack.c.l.b16 %v2884
    %v3180 = vunpack.c.l.b16 %v2885
    %v3181 = vunpack.c.l.b16 %v2886
    %v3182 = vunpack.c.l.b16 %v2887
    %v3183 = vunpack.c.l.b16 %v2888
    %v3184 = vunpack.c.l.b16 %v2889
    %v3185 = vunpack.c.l.b16 %v2890
    %v3186 = vunpack.c.l.b16 %v2891
    %v3187 = vunpack.c.l.b16 %v2892
    %v3188 = vunpack.c.l.b16 %v2893
    %v3189 = vunpack.c.l.b16 %v2894
    %v3190 = vunpack.c.l.b16 %v2895
    %v3191 = vunpack.c.l.b16 %v2896
    %v3192 = vunpack.c.l.b16 %v2897
    %v3193 = vunpack.c.l.b16 %v2898
    %v3194 = vunpack.c.l.b16 %v2899
    %v3195 = vunpack.c.l.b16 %v2900
    %v3196 = vunpack.c.l.b16 %v2901
    %v3197 = vunpack.c.l.b16 %v2902
    %v3198 = vunpack.c.l.b16 %v2903
    %v3199 = vunpack.c.l.b16 %v2904
    %v3200 = vunpack.c.l.b16 %v2905
    %v3201 = vunpack.c.l.b16 %v2906
    %v3202 = vunpack.c.l.b16 %v2907
    %v3203 = vunpack.c.l.b16 %v2908
    %v3204 = vunpack.c.l.b16 %v2909
    %v3205 = vunpack.c.l.b16 %v2910
    %v3206 = vunpack.c.l.b16 %v2911
    %v3207 = vunpack.c.l.b16 %v2912
    %v3208 = vunpack.c.l.b16 %v2913
    %v3209 = vunpack.c.l.b16 %v2914
    %v3210 = vunpack.c.l.b16 %v2915
    %v3211 = vunpack.c.l.b16 %v2916
    %v3212 = vunpack.c.l.b16 %v2917
    %v3213 = vunpack.c.l.b16 %v2918
    %v3214 = vunpack.c.l.b16 %v2919
    %v3215 = vunpack.c.l.b16 %v2920
    %v3216 = vunpack.c.l.b16 %v2921
    %v3217 = vunpack.c.l.b16 %v2922
    %v3218 = vunpack.c.l.b16 %v2923
    %v3219 = vunpack.c.l.b16 %v2924
    %v3220 = vunpack.c.l.b16 %v2925
    %v3221 = vunpack.c.l.b16 %v2926
    %v3222 = vunpack.c.l.b16 %v2927
    %v3223 = vunpack.c.l.b16 %v2928
    %v3224 = vunpack.c.l.b16 %v2929
    %v3225 = vunpack.c.l.b16 %v2930
    %v3226 = vunpack.c.l.b16 %v2931
    %v3227 = vunpack.c.l.b16 %v2932
    %v3228 = vunpack.c.l.b16 %v2933
    %v3229 = vunpack.c.l.b16 %v2934
    %v3230 = vunpack.c.l.b16 %v2935
    %v3231 = vunpack.c.l.b16 %v2936
    %v3232 = vunpack.c.l.b16 %v2937
    %v3233 = vunpack.c.l.b16 %v2938
    %v3234 = vunpack.c.l.b16 %v2939
    %v3235 = vpack.c.b16 %v3092, %v3091
    %v3236 = vpack.c.b16 %v3094, %v3093
    %v3237 = vpack.c.b16 %v3096, %v3095
    %v3238 = vpack.c.b16 %v3098, %v3097
    %v3239 = vpack.c.b16 %v3100, %v3099
    %v3240 = vpack.c.b16 %v3102, %v3101
    %v3241 = vpack.c.b16 %v3104, %v3103
    %v3242 = vpack.c.b16 %v3106, %v3105
    %v3243 = vpack.c.b16 %v3108, %v3107
    %v3244 = vpack.c.b16 %v3110, %v3109
    %v3245 = vpack.c.b16 %v3112, %v3111
    %v3246 = vpack.c.b16 %v3114, %v3113
    %v3247 = vpack.c.b16 %v3116, %v3115
    %v3248 = vpack.c.b16 %v3118, %v3117
    %v3249 = vpack.c.b16 %v3120, %v3119
    %v3250 = vpack.c.b16 %v3122, %v3121
    %v3251 = vpack.c.b16 %v3124, %v3123
    %v3252 = vpack.c.b16 %v3126, %v3125
    %v3253 = vpack.c.b16 %v3128, %v3127
    %v3254 = vpack.c.b16 %v3130, %v3129
    %v3255 = vpack.c.b16 %v3132, %v3131
    %v3256 = vpack.c.b16 %v3134, %v3133
    %v3257 = vpack.c.b16 %v3136, %v3135
    %v3258 = vpack.c.b16 %v3138, %v3137
    %v3259 = vpack.c.b16 %v3140, %v3139
    %v3260 = vpack.c.b16 %v3142, %v3141
    %v3261 = vpack.c.b16 %v3144, %v3143
    %v3262 = vpack.c.b16 %v3146, %v3145
    %v3263 = vpack.c.b16 %v3148, %v3147
    %v3264 = vpack.c.b16 %v3150, %v3149
    %v3265 = vpack.c.b16 %v3152, %v3151
    %v3266 = vpack.c.b16 %v3154, %v3153
    %v3267 = vpack.c.b16 %v3156, %v3155
    %v3268 = vpack.c.b16 %v3158, %v3157
    %v3269 = vpack.c.b16 %v3160, %v3159
    %v3270 = vpack.c.b16 %v3162, %v3161
    %v3271 = vpack.c.b16 %v3164, %v3163
    %v3272 = vpack.c.b16 %v3166, %v3165
    %v3273 = vpack.c.b16 %v3168, %v3167
    %v3274 = vpack.c.b16 %v3170, %v3169
    %v3275 = vpack.c.b16 %v3172, %v3171
    %v3276 = vpack.c.b16 %v3174, %v3173
    %v3277 = vpack.c.b16 %v3176, %v3175
    %v3278 = vpack.c.b16 %v3178, %v3177
    %v3279 = vpack.c.b16 %v3180, %v3179
    %v3280 = vpack.c.b16 %v3182, %v3181
    %v3281 = vpack.c.b16 %v3184, %v3183
    %v3282 = vpack.c.b16 %v3186, %v3185
    %v3283 = vpack.c.b16 %v3188, %v3187
    %v3284 = vpack.c.b16 %v3190, %v3189
    %v3285 = vpack.c.b16 %v3192, %v3191
    %v3286 = vpack.c.b16 %v3194, %v3193
    %v3287 = vpack.c.b16 %v3196, %v3195
    %v3288 = vpack.c.b16 %v3198, %v3197
    %v3289 = vpack.c.b16 %v3200, %v3199
    %v3290 = vpack.c.b16 %v3202, %v3201
    %v3291 = vpack.c.b16 %v3204, %v3203
    %v3292 = vpack.c.b16 %v3206, %v3205
    %v3293 = vpack.c.b16 %v3208, %v3207
    %v3294 = vpack.c.b16 %v3210, %v3209
    %v3295 = vpack.c.b16 %v3212, %v3211
    %v3296 = vpack.c.b16 %v3214, %v3213
    %v3297 = vpack.c.b16 %v3216, %v3215
    %v3298 = vpack.c.b16 %v3218, %v3217
    %v3299 = vpack.c.b16 %v3220, %v3219
    %v3300 = vpack.c.b16 %v3222, %v3221
    %v3301 = vpack.c.b16 %v3224, %v3223
    %v3302 = vpack.c.b16 %v3226, %v3225
    %v3303 = vpack.c.b16 %v3228, %v3227
    %v3304 = vpack.c.b16 %v3230, %v3229
    %v3305 = vpack.c.b16 %v3232, %v3231
    %v3306 = vpack.c.b16 %v3234, %v3233
    %3379 = vmatprep.subr.bf16.mxu0 0
    %3380 = vmatpush1.bf16.msra.mxu0 %v3235
    %3381 = vmatprep.subr.bf16.mxu0 0
    %3382 = vmatpush1.bf16.msra.mxu0 %v3236
    %3383 = vmatprep.subr.bf16.mxu0 0
    %3384 = vmatpush1.bf16.msra.mxu0 %v3237
    %3385 = vmatprep.subr.bf16.mxu0 0
    %3386 = vmatpush1.bf16.msra.mxu0 %v3238
    %3387 = vmatprep.subr.bf16.mxu0 0
    %3388 = vmatpush1.bf16.msra.mxu0 %v3239
    %3389 = vmatprep.subr.bf16.mxu0 0
    %3390 = vmatpush1.bf16.msra.mxu0 %v3240
    %3391 = vmatprep.subr.bf16.mxu0 0
    %3392 = vmatpush1.bf16.msra.mxu0 %v3241
    %3393 = vmatprep.subr.bf16.mxu0 0
    %3394 = vmatpush1.bf16.msra.mxu0 %v3242
    %3395 = vmatprep.subr.bf16.mxu0 0
    %3396 = vmatpush1.bf16.msra.mxu0 %v3243
    %3397 = vmatprep.subr.bf16.mxu0 0
    %3398 = vmatpush1.bf16.msra.mxu0 %v3244
    %3399 = vmatprep.subr.bf16.mxu0 0
    %3400 = vmatpush1.bf16.msra.mxu0 %v3245
    %3401 = vmatprep.subr.bf16.mxu0 0
    %3402 = vmatpush1.bf16.msra.mxu0 %v3246
    %3403 = vmatprep.subr.bf16.mxu0 0
    %3404 = vmatpush1.bf16.msra.mxu0 %v3247
    %3405 = vmatprep.subr.bf16.mxu0 0
    %3406 = vmatpush1.bf16.msra.mxu0 %v3248
    %3407 = vmatprep.subr.bf16.mxu0 0
    %3408 = vmatpush1.bf16.msra.mxu0 %v3249
    %3409 = vmatprep.subr.bf16.mxu0 0
    %3410 = vmatpush1.bf16.msra.mxu0 %v3250
    %3411 = vmatprep.mubr.bf16.mxu0 %v2788
    %3412 = vmatmul.mubr.bf16.gmra.mrb[0].mxu0 %v2787
    %v3413 = vpop.f32.mrb[0].mxu0
    %v3414 = vadd.f32 %v2945, %v3413
    %v3415 = vpop.f32.mrb[0].mxu0
    %v3416 = vpop.f32.mrb[0].mxu0
    %v3417 = vpop.f32.mrb[0].mxu0
    %3418 = vdwg.mxu0
    %3419 = vmatprep.subr.bf16.mxu0 0
    %3420 = vmatpush1.bf16.msra.mxu0 %v3251
    %3421 = vmatprep.subr.bf16.mxu0 0
    %3422 = vmatpush1.bf16.msra.mxu0 %v3252
    %3423 = vmatprep.subr.bf16.mxu0 0
    %3424 = vmatpush1.bf16.msra.mxu0 %v3253
    %3425 = vmatprep.subr.bf16.mxu0 0
    %3426 = vmatpush1.bf16.msra.mxu0 %v3254
    %3427 = vmatprep.subr.bf16.mxu0 0
    %3428 = vmatpush1.bf16.msra.mxu0 %v3255
    %3429 = vmatprep.subr.bf16.mxu0 0
    %3430 = vmatpush1.bf16.msra.mxu0 %v3256
    %3431 = vmatprep.subr.bf16.mxu0 0
    %3432 = vmatpush1.bf16.msra.mxu0 %v3257
    %3433 = vmatprep.subr.bf16.mxu0 0
    %3434 = vmatpush1.bf16.msra.mxu0 %v3258
    %3435 = vmatprep.subr.bf16.mxu0 0
    %3436 = vmatpush1.bf16.msra.mxu0 %v3259
    %3437 = vmatprep.subr.bf16.mxu0 0
    %3438 = vmatpush1.bf16.msra.mxu0 %v3260
    %3439 = vmatprep.subr.bf16.mxu0 0
    %3440 = vmatpush1.bf16.msra.mxu0 %v3261
    %3441 = vmatprep.subr.bf16.mxu0 0
    %3442 = vmatpush1.bf16.msra.mxu0 %v3262
    %3443 = vmatprep.subr.bf16.mxu0 0
    %3444 = vmatpush1.bf16.msra.mxu0 %v3263
    %3445 = vmatprep.subr.bf16.mxu0 0
    %3446 = vmatpush1.bf16.msra.mxu0 %v3264
    %3447 = vmatprep.subr.bf16.mxu0 0
    %3448 = vmatpush1.bf16.msra.mxu0 %v3265
    %3449 = vmatprep.subr.bf16.mxu0 0
    %3450 = vmatpush1.bf16.msra.mxu0 %v3266
    %3451 = vmatprep.mubr.bf16.mxu0 %v2790
    %3452 = vmatmul.mubr.bf16.gmra.mrb[0].mxu0 %v2789
    %v3453 = vpop.f32.mrb[0].mxu0
    %v3454 = vadd.f32 %v3414, %v3453
    %v3455 = vpop.f32.mrb[0].mxu0
    %v3456 = vpop.f32.mrb[0].mxu0
    %v3457 = vpop.f32.mrb[0].mxu0
    %3458 = vdwg.mxu0
    %3459 = vmatprep.subr.bf16.mxu0 0
    %3460 = vmatpush1.bf16.msra.mxu0 %v3267
    %3461 = vmatprep.subr.bf16.mxu0 0
    %3462 = vmatpush1.bf16.msra.mxu0 %v3268
    %3463 = vmatprep.subr.bf16.mxu0 0
    %3464 = vmatpush1.bf16.msra.mxu0 %v3269
    %3465 = vmatprep.subr.bf16.mxu0 0
    %3466 = vmatpush1.bf16.msra.mxu0 %v3270
    %3467 = vmatprep.subr.bf16.mxu0 0
    %3468 = vmatpush1.bf16.msra.mxu0 %v3271
    %3469 = vmatprep.subr.bf16.mxu0 0
    %3470 = vmatpush1.bf16.msra.mxu0 %v3272
    %3471 = vmatprep.subr.bf16.mxu0 0
    %3472 = vmatpush1.bf16.msra.mxu0 %v3273
    %3473 = vmatprep.subr.bf16.mxu0 0
    %3474 = vmatpush1.bf16.msra.mxu0 %v3274
    %3475 = vmatprep.subr.bf16.mxu0 0
    %3476 = vmatpush1.bf16.msra.mxu0 %v3275
    %3477 = vmatprep.subr.bf16.mxu0 0
    %3478 = vmatpush1.bf16.msra.mxu0 %v3276
    %3479 = vmatprep.subr.bf16.mxu0 0
    %3480 = vmatpush1.bf16.msra.mxu0 %v3277
    %3481 = vmatprep.subr.bf16.mxu0 0
    %3482 = vmatpush1.bf16.msra.mxu0 %v3278
    %3483 = vmatprep.subr.bf16.mxu0 0
    %3484 = vmatpush1.bf16.msra.mxu0 %v3279
    %3485 = vmatprep.subr.bf16.mxu0 0
    %3486 = vmatpush1.bf16.msra.mxu0 %v3280
    %3487 = vmatprep.subr.bf16.mxu0 0
    %3488 = vmatpush1.bf16.msra.mxu0 %v3281
    %3489 = vmatprep.subr.bf16.mxu0 0
    %3490 = vmatpush1.bf16.msra.mxu0 %v3282
    %3491 = vmatprep.mubr.bf16.mxu0 %v2792
    %3492 = vmatmul.mubr.bf16.gmra.mrb[0].mxu0 %v2791
    %v3493 = vpop.f32.mrb[0].mxu0
    %v3494 = vadd.f32 %v3454, %v3493
    %v3495 = vpop.f32.mrb[0].mxu0
    %v3496 = vpop.f32.mrb[0].mxu0
    %v3497 = vpop.f32.mrb[0].mxu0
    %3498 = vdwg.mxu0
    %3499 = vmatprep.subr.bf16.mxu0 0
    %3500 = vmatpush1.bf16.msra.mxu0 %v3283
    %3501 = vmatprep.subr.bf16.mxu0 0
    %3502 = vmatpush1.bf16.msra.mxu0 %v3284
    %3503 = vmatprep.subr.bf16.mxu0 0
    %3504 = vmatpush1.bf16.msra.mxu0 %v3285
    %3505 = vmatprep.subr.bf16.mxu0 0
    %3506 = vmatpush1.bf16.msra.mxu0 %v3286
    %3507 = vmatprep.subr.bf16.mxu0 0
    %3508 = vmatpush1.bf16.msra.mxu0 %v3287
    %3509 = vmatprep.subr.bf16.mxu0 0
    %3510 = vmatpush1.bf16.msra.mxu0 %v3288
    %3511 = vmatprep.subr.bf16.mxu0 0
    %3512 = vmatpush1.bf16.msra.mxu0 %v3289
    %3513 = vmatprep.subr.bf16.mxu0 0
    %3514 = vmatpush1.bf16.msra.mxu0 %v3290
    %3515 = vmatprep.subr.bf16.mxu0 0
    %3516 = vmatpush1.bf16.msra.mxu0 %v3291
    %3517 = vmatprep.subr.bf16.mxu0 0
    %3518 = vmatpush1.bf16.msra.mxu0 %v3292
    %3519 = vmatprep.subr.bf16.mxu0 0
    %3520 = vmatpush1.bf16.msra.mxu0 %v3293
    %3521 = vmatprep.subr.bf16.mxu0 0
    %3522 = vmatpush1.bf16.msra.mxu0 %v3294
    %3523 = vmatprep.subr.bf16.mxu0 0
    %3524 = vmatpush1.bf16.msra.mxu0 %v3295
    %3525 = vmatprep.subr.bf16.mxu0 0
    %3526 = vmatpush1.bf16.msra.mxu0 %v3296
    %3527 = vmatprep.subr.bf16.mxu0 0
    %3528 = vmatpush1.bf16.msra.mxu0 %v3297
    %3529 = vmatprep.subr.bf16.mxu0 0
    %3530 = vmatpush1.bf16.msra.mxu0 %v3298
    %3531 = vmatprep.mubr.bf16.mxu0 %v2794
    %3532 = vmatmul.mubr.bf16.gmra.mrb[0].mxu0 %v2793
    %v3533 = vpop.f32.mrb[0].mxu0
    %v3534 = vadd.f32 %v3494, %v3533
    %v3535 = vpop.f32.mrb[0].mxu0
    %v3536 = vpop.f32.mrb[0].mxu0
    %v3537 = vpop.f32.mrb[0].mxu0
    %3538 = vdwg.mxu0
    %3539 = vmatprep.subr.bf16.mxu0 0
    %3540 = vmatpush1.bf16.msra.mxu0 %v3299
    %3541 = vmatprep.subr.bf16.mxu0 0
    %3542 = vmatpush1.bf16.msra.mxu0 %v3300
    %3543 = vmatprep.subr.bf16.mxu0 0
    %3544 = vmatpush1.bf16.msra.mxu0 %v3301
    %3545 = vmatprep.subr.bf16.mxu0 0
    %3546 = vmatpush1.bf16.msra.mxu0 %v3302
    %3547 = vmatprep.subr.bf16.mxu0 0
    %3548 = vmatpush1.bf16.msra.mxu0 %v3303
    %3549 = vmatprep.subr.bf16.mxu0 0
    %3550 = vmatpush1.bf16.msra.mxu0 %v3304
    %3551 = vmatprep.subr.bf16.mxu0 0
    %3552 = vmatpush1.bf16.msra.mxu0 %v3305
    %3553 = vmatprep.subr.bf16.mxu0 0
    %3554 = vmatpush1.bf16.msra.mxu0 %v3306
    %3555 = vmatprep.subr.bf16.mxu0 0
    %3556 = vmatpush1.bf16.msra.mxu0 0
    %3557 = vmatprep.subr.bf16.mxu0 0
    %3558 = vmatpush1.bf16.msra.mxu0 0
    %3559 = vmatprep.subr.bf16.mxu0 0
    %3560 = vmatpush1.bf16.msra.mxu0 0
    %3561 = vmatprep.subr.bf16.mxu0 0
    %3562 = vmatpush1.bf16.msra.mxu0 0
    %3563 = vmatprep.subr.bf16.mxu0 0
    %3564 = vmatpush1.bf16.msra.mxu0 0
    %3565 = vmatprep.subr.bf16.mxu0 0
    %3566 = vmatpush1.bf16.msra.mxu0 0
    %3567 = vmatprep.subr.bf16.mxu0 0
    %3568 = vmatpush1.bf16.msra.mxu0 0
    %3569 = vmatprep.subr.bf16.mxu0 0
    %3570 = vmatpush1.bf16.msra.mxu0 0
    %3571 = vmatprep.mubr.bf16.mxu0 0
    %3572 = vmatmul.mubr.bf16.gmra.mrb[0].mxu0 %v2795
    %v3573 = vpop.f32.mrb[0].mxu0
    %v3574 = vadd.f32 %v3534, %v3573
    %v3575 = vpop.f32.mrb[0].mxu0
    %v3576 = vpop.f32.mrb[0].mxu0
    %v3577 = vpop.f32.mrb[0].mxu0
    %3578 = vdwg.mxu0
    %3579 = vst [vmem:[#allocation8] sm:$0x3] %v3574
    // Predicated region
    $region30: #{tpu_custom_call.1} parent=1 // pred_check
      _
    $region31: #{tpu_custom_call.1} parent=1 // pred_check_branch
      %3581 = sbr.rel (0) target = $region33
    $region32: #{tpu_custom_call.1} parent=1 // pred_region
      %s3583 = ssub.s32 32, 32
      %3584 = vsyncadd [#allocation4], %s3583
      %s3586 = sshll.u32 [#allocation8], 4
      %s3587 = int_to_ptr.vmem [resolvable:$true] %s3586
      %3589 = dma.vmem_to_hbm [thread:$0]  %s3587, 32, %s4, [#allocation4]
    $region33: #{tpu_custom_call.1} parent=1 // pred_fallthru
      _
    // Predicated region
    $region34: #{tpu_custom_call.1} parent=1 // pred_check
      _
    $region35: #{tpu_custom_call.1} parent=1 // pred_check_branch
      %3591 = sbr.rel (0) target = $region37
    $region36: #{tpu_custom_call.1} parent=1 // pred_region
      %3592 = dma.done [#allocation4], 32
    $region37: #{tpu_custom_call.1} parent=1 // pred_fallthru
      _
    %3593 = vsyncpa [#allocation3], 1
    %3594 = vsyncpa [#allocation6], 1
    %3595 = vsyncpa [#allocation4], 1

</llo_original>
